<compile_context>
chip_gen: v7x
topology: tpu7x:2x2x1
jax: 0.10.0
libtpu: 0.0.40
codegen_flags: <defaults>
</compile_context>

<pallas_src>
import functools

import numpy as np
import jax
import jax.numpy as jnp
from jax import lax
from jax.experimental import pallas as pl
from jax.experimental.pallas import tpu as pltpu

BN_EPS = 1e-5
VMEM_LIMIT = 32 * 1024 * 1024        # explicit scoped-VMEM limit (safe on v5e/v6e/v7x)
VMEM_STEP_BUDGET = 8 * 1024 * 1024   # per-grid-step working-set target (double-buffer aware)
TARGET_ROWS = 256                    # ~M rows per tile (production: 512-1024)


# ----------------------------------------------------------------------------
# Small helpers (tile sizing, layout plumbing)
# ----------------------------------------------------------------------------
def _rup(v, m):
    return -(-v // m) * m


def _vmem_tile_bytes(shape, dtype):
    """Rough VMEM footprint of one tile: last two dims padded to (sublane, 128)."""
    itemsize = np.dtype(dtype).itemsize
    sub = 32 // itemsize                       # 8 sublanes f32, 16 bf16
    dims = (1, 1) + tuple(int(d) for d in shape)
    lead = int(np.prod(dims[:-2]))
    return lead * _rup(dims[-2], sub) * _rup(dims[-1], 128) * itemsize


def _pick_batch_tile(n, rows_per_image, step_bytes_per_image):
    """Largest batch tile (dividing n) near TARGET_ROWS rows and under VMEM budget."""
    nb = max(1, min(n, max(1, TARGET_ROWS // max(1, rows_per_image))))
    while nb > 1 and (n % nb != 0 or nb * step_bytes_per_image > VMEM_STEP_BUDGET):
        nb -= 1
    return nb


def _compiler_params():
    return pltpu.CompilerParams(dimension_semantics=("parallel",),
                                vmem_limit_bytes=VMEM_LIMIT)


def _w_to_matrix(w_oihw):
    """PyTorch OIHW conv weight -> [KH*KW*Cin, Cout] bf16 (matches im2col order)."""
    o, i, kh, kw = w_oihw.shape
    return (jnp.transpose(w_oihw, (2, 3, 1, 0))
            .reshape(kh * kw * i, o).astype(jnp.bfloat16))


def _make_phases(x_in, ksize, stride):
    """Polyphase split so that every in-kernel tap view is a unit-stride slice.

    Returns (phases [P, N, Hq, Wq, C], taps [(phase_idx, oh, ow)], ho, wo).
    stride == 1 -> a single phase (just x_in with a leading axis, no copy).
    """
    n, hi, wi, cin = x_in.shape
    ho = (hi - ksize) // stride + 1
    wo = (wi - ksize) // stride + 1
    hq, wq = _rup(hi, stride) // stride, _rup(wi, stride) // stride
    needed, taps = [], []
    for kh in range(ksize):
        for kw in range(ksize):
            ab = (kh % stride, kw % stride)
            if ab not in needed:
                needed.append(ab)
            taps.append((needed.index(ab), kh // stride, kw // stride))
    phases = []
    for (a, b) in needed:
        ph = x_in[:, a::stride, b::stride, :]
        ph = jnp.pad(ph, ((0, 0), (0, hq - ph.shape[1]),
                          (0, wq - ph.shape[2]), (0, 0)))
        phases.append(ph)
    return jnp.stack(phases, axis=0), tuple(taps), ho, wo


# ----------------------------------------------------------------------------
# Kernel 1: conv (in-VMEM im2col, single bf16 MXU matmul) + per-tile BN partials
# ----------------------------------------------------------------------------
def _conv_stats_kernel(phases_ref, w_ref, raw_ref, stats_ref, *, taps, ho, wo):
    nb = phases_ref.shape[1]
    cin = phases_ref.shape[-1]
    m = nb * ho * wo

    # im2col built in VMEM from unit-stride shifted views (no HBM tap stack).
    views = [phases_ref[p, :, oh:oh + ho, ow:ow + wo, :] for (p, oh, ow) in taps]
    lhs = views[0] if len(views) == 1 else jnp.concatenate(views, axis=-1)
    lhs = lhs.reshape(m, len(taps) * cin)                       # bf16

    # One MXU matmul: bf16 in, f32 accumulate.
    acc = jnp.dot(lhs, w_ref[...], preferred_element_type=jnp.float32)
    raw_ref[...] = acc

    # One-pass BN partials for this tile (reduced across tiles outside).
    s = jnp.sum(acc, axis=0, keepdims=True)
    ss = jnp.sum(acc * acc, axis=0, keepdims=True)
    stats_ref[...] = jnp.concatenate([s, ss], axis=0)[None]


def _conv_partial_stats(x_in, w_oihw, ksize, stride):
    """x_in: bf16 NHWC (already halo-padded for 3x3 convs).
    Returns raw conv output [N*HO*WO, Cout] f32, per-tile stats [T, 2, Cout], HO, WO."""
    n = x_in.shape[0]
    phases, taps, ho, wo = _make_phases(x_in, ksize, stride)
    p, _, hq, wq, cin = phases.shape
    w2d = _w_to_matrix(w_oihw)
    kkc, cout = w2d.shape

    rows = ho * wo
    per_img = (2 * (p * _vmem_tile_bytes((hq, wq, cin), jnp.bfloat16)
                    + _vmem_tile_bytes((rows, cout), jnp.float32))
               + _vmem_tile_bytes((rows, kkc), jnp.bfloat16)
               + _vmem_tile_bytes((rows, cout), jnp.float32))
    nb = _pick_batch_tile(n, rows, per_img)
    t = n // nb
    m_tile = nb * rows

    kernel = functools.partial(_conv_stats_kernel, taps=taps, ho=ho, wo=wo)
    raw, stats = pl.pallas_call(
        kernel,
        grid=(t,),
        out_shape=(jax.ShapeDtypeStruct((n * rows, cout), jnp.float32),
                   jax.ShapeDtypeStruct((t, 2, cout), jnp.float32)),
        in_specs=[pl.BlockSpec((p, nb, hq, wq, cin), lambda i: (0, i, 0, 0, 0)),
                  pl.BlockSpec((kkc, cout), lambda i: (0, 0))],
        out_specs=(pl.BlockSpec((m_tile, cout), lambda i: (i, 0)),
                   pl.BlockSpec((1, 2, cout), lambda i: (i, 0, 0))),
        compiler_params=_compiler_params(),
    )(phases, w2d)
    return raw, stats, ho, wo


def _bn_scale_shift(stats, gamma, beta, m_total):
    """Fold per-tile (sum, sumsq) partials into per-channel scale/shift (f32)."""
    s = jnp.sum(stats[:, 0, :], axis=0)
    ss = jnp.sum(stats[:, 1, :], axis=0)
    mean = s / m_total
    var = jnp.maximum(ss / m_total - mean * mean, 0.0)    # biased (train-mode) variance
    scale = gamma.astype(jnp.float32) * lax.rsqrt(var + BN_EPS)
    shift = beta.astype(jnp.float32) - mean * scale
    return scale.reshape(1, -1), shift.reshape(1, -1)


# ----------------------------------------------------------------------------
# Kernel 2: bn1-apply + ReLU + zero halo-pad  (bf16 output = conv2's input)
# ----------------------------------------------------------------------------
def _bn_relu_pad_kernel(raw_ref, scale_ref, shift_ref, out_ref, *, ho, wo):
    nb, _, _, c = out_ref.shape
    y = jnp.maximum(raw_ref[...] * scale_ref[...] + shift_ref[...], 0.0)
    out_ref[...] = jnp.zeros(out_ref.shape, out_ref.dtype)            # zero halo
    out_ref[:, 1:1 + ho, 1:1 + wo, :] = y.reshape(nb, ho, wo, c).astype(out_ref.dtype)


def _bn_relu_pad(raw, scale, shift, n, ho, wo, c):
    rows = ho * wo
    per_img = 2 * (_vmem_tile_bytes((rows, c), jnp.float32)
                   + _vmem_tile_bytes((ho + 2, wo + 2, c), jnp.bfloat16))
    nb = _pick_batch_tile(n, rows, per_img)
    t = n // nb
    m_tile = nb * rows
    kernel = functools.partial(_bn_relu_pad_kernel, ho=ho, wo=wo)
    return pl.pallas_call(
        kernel,
        grid=(t,),
        out_shape=jax.ShapeDtypeStruct((n, ho + 2, wo + 2, c), jnp.bfloat16),
        in_specs=[pl.BlockSpec((m_tile, c), lambda i: (i, 0)),
                  pl.BlockSpec((1, c), lambda i: (0, 0)),
                  pl.BlockSpec((1, c), lambda i: (0, 0))],
        out_specs=pl.BlockSpec((nb, ho + 2, wo + 2, c), lambda i: (i, 0, 0, 0)),
        compiler_params=_compiler_params(),
    )(raw, scale, shift)


# ----------------------------------------------------------------------------
# Kernel 3: bn2-apply + shortcut (projection-BN or identity) + add + ReLU
# ----------------------------------------------------------------------------
def _bn_add_relu_kernel(raw_ref, scale_ref, shift_ref,
                        res_ref, res_scale_ref, res_shift_ref, out_ref):
    y = raw_ref[...] * scale_ref[...] + shift_ref[...]
    y = y + res_ref[...] * res_scale_ref[...] + res_shift_ref[...]
    out_ref[...] = jnp.maximum(y, 0.0).astype(out_ref.dtype)


def _bn_add_relu(raw, scale, shift, res, res_scale, res_shift, n, ho, wo, c):
    rows = ho * wo
    per_img = 2 * 3 * _vmem_tile_bytes((rows, c), jnp.float32)
    nb = _pick_batch_tile(n, rows, per_img)
    t = n // nb
    m_tile = nb * rows
    return pl.pallas_call(
        _bn_add_relu_kernel,
        grid=(t,),
        out_shape=jax.ShapeDtypeStruct((n * rows, c), jnp.float32),
        in_specs=[pl.BlockSpec((m_tile, c), lambda i: (i, 0)),
                  pl.BlockSpec((1, c), lambda i: (0, 0)),
                  pl.BlockSpec((1, c), lambda i: (0, 0)),
                  pl.BlockSpec((m_tile, c), lambda i: (i, 0)),
                  pl.BlockSpec((1, c), lambda i: (0, 0)),
                  pl.BlockSpec((1, c), lambda i: (0, 0))],
        out_specs=pl.BlockSpec((m_tile, c), lambda i: (i, 0)),
        compiler_params=_compiler_params(),
    )(raw, scale, shift, res, res_scale, res_shift)


# ----------------------------------------------------------------------------
# Parameters / forward
# ----------------------------------------------------------------------------
def init_basic_block_params(key, in_planes, planes, stride):
    ks = jax.random.split(key, 9)
    params = {
        "w1": 0.1 * jax.random.normal(ks[0], (planes, in_planes, 3, 3), jnp.float32),
        "gamma1": 1.0 + 0.1 * jax.random.normal(ks[1], (planes,), jnp.float32),
        "beta1": 0.1 * jax.random.normal(ks[2], (planes,), jnp.float32),
        "w2": 0.1 * jax.random.normal(ks[3], (planes, planes, 3, 3), jnp.float32),
        "gamma2": 1.0 + 0.1 * jax.random.normal(ks[4], (planes,), jnp.float32),
        "beta2": 0.1 * jax.random.normal(ks[5], (planes,), jnp.float32),
    }
    if stride != 1 or in_planes != planes:  # expansion == 1
        params["w_sc"] = 0.1 * jax.random.normal(ks[6], (planes, in_planes, 1, 1), jnp.float32)
        params["gamma_sc"] = 1.0 + 0.1 * jax.random.normal(ks[7], (planes,), jnp.float32)
        params["beta_sc"] = 0.1 * jax.random.normal(ks[8], (planes,), jnp.float32)
    return params


def basic_block_forward(x_nchw, params, stride):
    """BasicBlock.forward. Input/output in PyTorch NCHW convention."""
    x = jnp.transpose(x_nchw, (0, 2, 3, 1)).astype(jnp.float32)   # NHWC f32
    n, h, w, cin = x.shape
    planes = params["w1"].shape[0]
    x_bf = x.astype(jnp.bfloat16)

    # conv1 + batch-stat partials, then fused bn1+relu+zero-pad (bf16, halo'd).
    x_pad = jnp.pad(x_bf, ((0, 0), (1, 1), (1, 1), (0, 0)))
    raw1, st1, ho, wo = _conv_partial_stats(x_pad, params["w1"], ksize=3, stride=stride)
    sc1, sh1 = _bn_scale_shift(st1, params["gamma1"], params["beta1"], n * ho * wo)
    out1_pad = _bn_relu_pad(raw1, sc1, sh1, n, ho, wo, planes)

    # conv2 (stride 1) directly from the already-padded bf16 out1.
    raw2, st2, ho2, wo2 = _conv_partial_stats(out1_pad, params["w2"], ksize=3, stride=1)
    sc2, sh2 = _bn_scale_shift(st2, params["gamma2"], params["beta2"], n * ho2 * wo2)

    # Shortcut branch.
    if "w_sc" in params:
        raw_sc, st_sc, _, _ = _conv_partial_stats(x_bf, params["w_sc"], ksize=1, stride=stride)
        rs, rb = _bn_scale_shift(st_sc, params["gamma_sc"], params["beta_sc"], n * ho * wo)
        res = raw_sc
    else:
        res = x.reshape(n * h * w, cin)                 # identity residual in f32
        rs = jnp.ones((1, planes), jnp.float32)
        rb = jnp.zeros((1, planes), jnp.float32)

    # bn2 + shortcut(+BN) + add + relu, fused.
    out2d = _bn_add_relu(raw2, sc2, sh2, res, rs, rb, n, ho2, wo2, planes)
    out = out2d.reshape(n, ho2, wo2, planes)
    return jnp.transpose(out, (0, 3, 1, 2))             # -> NCHW


# ----------------------------------------------------------------------------
# Pure-JAX f32 reference (lax.conv) for correctness checking
# ----------------------------------------------------------------------------
def _ref_conv(x_nhwc, w_oihw, stride, padding):
    return lax.conv_general_dilated(
        x_nhwc, jnp.transpose(w_oihw, (2, 3, 1, 0)),
        window_strides=(stride, stride),
        padding=((padding, padding), (padding, padding)),
        dimension_numbers=("NHWC", "HWIO", "NHWC"))


def _ref_bn(x, gamma, beta):
    mean = jnp.mean(x, axis=(0, 1, 2), keepdims=True)
    var = jnp.mean((x - mean) ** 2, axis=(0, 1, 2), keepdims=True)
    return (x - mean) * lax.rsqrt(var + BN_EPS) * gamma + beta


def basic_block_ref(x_nchw, params, stride):
    x = jnp.transpose(x_nchw, (0, 2, 3, 1)).astype(jnp.float32)
    out = jax.nn.relu(_ref_bn(_ref_conv(x, params["w1"], stride, 1),
                              params["gamma1"], params["beta1"]))
    out = _ref_bn(_ref_conv(out, params["w2"], 1, 1),
                  params["gamma2"], params["beta2"])
    if "w_sc" in params:
        sc = _ref_bn(_ref_conv(x, params["w_sc"], stride, 0),
                     params["gamma_sc"], params["beta_sc"])
    else:
        sc = x
    out = jax.nn.relu(sc + out)
    return jnp.transpose(out, (0, 3, 1, 2))


# ----------------------------------------------------------------------------
if __name__ == "__main__":
    key = jax.random.PRNGKey(0)
    kx, kp1, kp2 = jax.random.split(key, 3)

    # PyTorch-convention NCHW input: batch=2, in_planes=4, 16x16 spatial.
    x = jax.random.normal(kx, (2, 4, 16, 16), jnp.float32)

    # bf16 MXU operands -> tolerance loosened vs the f32 reference.
    TOL = dict(rtol=5e-2, atol=5e-2)

    # Case 1: downsampling block (stride=2, 4 -> 8 planes, conv1x1+BN shortcut).
    params1 = init_basic_block_params(kp1, in_planes=4, planes=8, stride=2)
    y1 = jax.block_until_ready(basic_block_forward(x, params1, stride=2))
    assert y1.shape == (2, 8, 8, 8)
    r1 = basic_block_ref(x, params1, stride=2)
    assert bool(jnp.allclose(y1, r1, **TOL)), "stride-2 block mismatch"

    # Case 2: identity-shortcut block (stride=1, 4 -> 4 planes).
    params2 = init_basic_block_params(kp2, in_planes=4, planes=4, stride=1)
    y2 = jax.block_until_ready(basic_block_forward(x, params2, stride=1))
    assert y2.shape == (2, 4, 16, 16)
    r2 = basic_block_ref(x, params2, stride=1)
    assert bool(jnp.allclose(y2, r2, **TOL)), "stride-1 block mismatch"

    print("KERNEL_OK")
</pallas_src>

<mosaic_0001>
module attributes {stable_mosaic.version = 11 : i64} {
  func.func @_conv_stats_kernel(%arg0: i32, %arg1: memref<4x2x9x9x4xbf16, #tpu.memory_space<vmem>>, %arg2: memref<36x8xbf16, #tpu.memory_space<vmem>>, %arg3: memref<128x8xf32, #tpu.memory_space<vmem>>, %arg4: memref<1x2x8xf32, #tpu.memory_space<vmem>>) attributes {dimension_semantics = [#tpu.dimension_semantics<parallel>], iteration_bounds = array<i64: 1>, scalar_prefetch = 0 : i64, scratch_operands = 0 : i64, tpu.core_type = #tpu.core_type<tc>, window_params = [{transform_indices = @transform_0, window_bounds = array<i64: 4, 2, 9, 9, 4>}, {pipeline_mode = #tpu.pipeline_mode<synchronous>, transform_indices = @transform_1, window_bounds = array<i64: 36, 8>}, {transform_indices = @transform_2, window_bounds = array<i64: 128, 8>}, {transform_indices = @transform_3, window_bounds = array<i64: 1, 2, 8>}]} {
    %c0 = arith.constant 0 : index
    %c0_0 = arith.constant 0 : index
    %c0_1 = arith.constant 0 : index
    %c0_2 = arith.constant 0 : index
    %c0_3 = arith.constant 0 : index
    %0 = vector.load %arg1[%c0, %c0_0, %c0_1, %c0_2, %c0_3] : memref<4x2x9x9x4xbf16, #tpu.memory_space<vmem>>, vector<1x2x8x8x4xbf16>
    %1 = vector.shape_cast %0 : vector<1x2x8x8x4xbf16> to vector<2x8x8x4xbf16>
    %c1 = arith.constant 1 : index
    %c0_4 = arith.constant 0 : index
    %c0_5 = arith.constant 0 : index
    %c0_6 = arith.constant 0 : index
    %c0_7 = arith.constant 0 : index
    %2 = vector.load %arg1[%c1, %c0_4, %c0_5, %c0_6, %c0_7] : memref<4x2x9x9x4xbf16, #tpu.memory_space<vmem>>, vector<1x2x8x8x4xbf16>
    %3 = vector.shape_cast %2 : vector<1x2x8x8x4xbf16> to vector<2x8x8x4xbf16>
    %c0_8 = arith.constant 0 : index
    %c0_9 = arith.constant 0 : index
    %c0_10 = arith.constant 0 : index
    %c1_11 = arith.constant 1 : index
    %c0_12 = arith.constant 0 : index
    %4 = vector.load %arg1[%c0_8, %c0_9, %c0_10, %c1_11, %c0_12] : memref<4x2x9x9x4xbf16, #tpu.memory_space<vmem>>, vector<1x2x8x8x4xbf16>
    %5 = vector.shape_cast %4 : vector<1x2x8x8x4xbf16> to vector<2x8x8x4xbf16>
    %c2 = arith.constant 2 : index
    %c0_13 = arith.constant 0 : index
    %c0_14 = arith.constant 0 : index
    %c0_15 = arith.constant 0 : index
    %c0_16 = arith.constant 0 : index
    %6 = vector.load %arg1[%c2, %c0_13, %c0_14, %c0_15, %c0_16] : memref<4x2x9x9x4xbf16, #tpu.memory_space<vmem>>, vector<1x2x8x8x4xbf16>
    %7 = vector.shape_cast %6 : vector<1x2x8x8x4xbf16> to vector<2x8x8x4xbf16>
    %c3 = arith.constant 3 : index
    %c0_17 = arith.constant 0 : index
    %c0_18 = arith.constant 0 : index
    %c0_19 = arith.constant 0 : index
    %c0_20 = arith.constant 0 : index
    %8 = vector.load %arg1[%c3, %c0_17, %c0_18, %c0_19, %c0_20] : memref<4x2x9x9x4xbf16, #tpu.memory_space<vmem>>, vector<1x2x8x8x4xbf16>
    %9 = vector.shape_cast %8 : vector<1x2x8x8x4xbf16> to vector<2x8x8x4xbf16>
    %c2_21 = arith.constant 2 : index
    %c0_22 = arith.constant 0 : index
    %c0_23 = arith.constant 0 : index
    %c1_24 = arith.constant 1 : index
    %c0_25 = arith.constant 0 : index
    %10 = vector.load %arg1[%c2_21, %c0_22, %c0_23, %c1_24, %c0_25] : memref<4x2x9x9x4xbf16, #tpu.memory_space<vmem>>, vector<1x2x8x8x4xbf16>
    %11 = vector.shape_cast %10 : vector<1x2x8x8x4xbf16> to vector<2x8x8x4xbf16>
    %c0_26 = arith.constant 0 : index
    %c0_27 = arith.constant 0 : index
    %c1_28 = arith.constant 1 : index
    %c0_29 = arith.constant 0 : index
    %c0_30 = arith.constant 0 : index
    %12 = vector.load %arg1[%c0_26, %c0_27, %c1_28, %c0_29, %c0_30] : memref<4x2x9x9x4xbf16, #tpu.memory_space<vmem>>, vector<1x2x8x8x4xbf16>
    %13 = vector.shape_cast %12 : vector<1x2x8x8x4xbf16> to vector<2x8x8x4xbf16>
    %c1_31 = arith.constant 1 : index
    %c0_32 = arith.constant 0 : index
    %c1_33 = arith.constant 1 : index
    %c0_34 = arith.constant 0 : index
    %c0_35 = arith.constant 0 : index
    %14 = vector.load %arg1[%c1_31, %c0_32, %c1_33, %c0_34, %c0_35] : memref<4x2x9x9x4xbf16, #tpu.memory_space<vmem>>, vector<1x2x8x8x4xbf16>
    %15 = vector.shape_cast %14 : vector<1x2x8x8x4xbf16> to vector<2x8x8x4xbf16>
    %c0_36 = arith.constant 0 : index
    %c0_37 = arith.constant 0 : index
    %c1_38 = arith.constant 1 : index
    %c1_39 = arith.constant 1 : index
    %c0_40 = arith.constant 0 : index
    %16 = vector.load %arg1[%c0_36, %c0_37, %c1_38, %c1_39, %c0_40] : memref<4x2x9x9x4xbf16, #tpu.memory_space<vmem>>, vector<1x2x8x8x4xbf16>
    %17 = vector.shape_cast %16 : vector<1x2x8x8x4xbf16> to vector<2x8x8x4xbf16>
    %18 = tpu.concatenate %1, %3, %5, %7, %9, %11, %13, %15, %17 in 3 : vector<2x8x8x4xbf16>, vector<2x8x8x4xbf16>, vector<2x8x8x4xbf16>, vector<2x8x8x4xbf16>, vector<2x8x8x4xbf16>, vector<2x8x8x4xbf16>, vector<2x8x8x4xbf16>, vector<2x8x8x4xbf16>, vector<2x8x8x4xbf16> -> vector<2x8x8x36xbf16>
    %19 = vector.shape_cast %18 : vector<2x8x8x36xbf16> to vector<128x36xbf16>
    %c0_41 = arith.constant 0 : index
    %c0_42 = arith.constant 0 : index
    %20 = vector.load %arg2[%c0_41, %c0_42] : memref<36x8xbf16, #tpu.memory_space<vmem>>, vector<36x8xbf16>
    %cst = arith.constant dense<0.000000e+00> : vector<128x8xf32>
    %21 = tpu.matmul %19, %20, %cst {dimension_numbers = #tpu.dot_dimension_numbers<[1], [0], [0], [1], [0, 0, 1, 1], [], []>} : vector<128x36xbf16>, vector<36x8xbf16>, vector<128x8xf32> -> vector<128x8xf32>
    %c0_43 = arith.constant 0 : index
    %c0_44 = arith.constant 0 : index
    %22 = vector.load %arg3[%c0_43, %c0_44] : memref<128x8xf32, #tpu.memory_space<vmem>>, vector<128x8xf32>
    tpu.vector_store %arg3[%c0_43, %c0_44], %21 {strides = array<i32>} : memref<128x8xf32, #tpu.memory_space<vmem>>, vector<128x8xf32>,
    %cst_45 = arith.constant dense<0.000000e+00> : vector<8xf32>
    %23 = vector.multi_reduction <add>, %21, %cst_45 [0] : vector<128x8xf32> to vector<8xf32>
    %24 = vector.shape_cast %23 : vector<8xf32> to vector<1x8xf32>
    %25 = arith.mulf %21, %21 : vector<128x8xf32>
    %cst_46 = arith.constant dense<0.000000e+00> : vector<8xf32>
    %26 = vector.multi_reduction <add>, %25, %cst_46 [0] : vector<128x8xf32> to vector<8xf32>
    %27 = vector.shape_cast %26 : vector<8xf32> to vector<1x8xf32>
    %28 = tpu.concatenate %24, %27 in 0 : vector<1x8xf32>, vector<1x8xf32> -> vector<2x8xf32>
    %29 = vector.shape_cast %28 : vector<2x8xf32> to vector<1x2x8xf32>
    %c0_47 = arith.constant 0 : index
    %c0_48 = arith.constant 0 : index
    %c0_49 = arith.constant 0 : index
    %30 = vector.load %arg4[%c0_47, %c0_48, %c0_49] : memref<1x2x8xf32, #tpu.memory_space<vmem>>, vector<1x2x8xf32>
    tpu.vector_store %arg4[%c0_47, %c0_48, %c0_49], %29 {strides = array<i32>} : memref<1x2x8xf32, #tpu.memory_space<vmem>>, vector<1x2x8xf32>,
    return
  }
  func.func @transform_0(%arg0: i32) -> (i32, i32, i32, i32, i32) {
    %c0_i32 = arith.constant 0 : i32
    %c0_i32_0 = arith.constant 0 : i32
    %c0_i32_1 = arith.constant 0 : i32
    %c0_i32_2 = arith.constant 0 : i32
    %c0_i32_3 = arith.constant 0 : i32
    return %c0_i32, %arg0, %c0_i32_0, %c0_i32_1, %c0_i32_2 : i32, i32, i32, i32, i32
  }
  func.func @transform_1(%arg0: i32) -> (i32, i32) {
    %c0_i32 = arith.constant 0 : i32
    %c0_i32_0 = arith.constant 0 : i32
    %c0_i32_1 = arith.constant 0 : i32
    return %c0_i32, %c0_i32_0 : i32, i32
  }
  func.func @transform_2(%arg0: i32) -> (i32, i32) {
    %c0_i32 = arith.constant 0 : i32
    %c0_i32_0 = arith.constant 0 : i32
    return %arg0, %c0_i32 : i32, i32
  }
  func.func @transform_3(%arg0: i32) -> (i32, i32, i32) {
    %c0_i32 = arith.constant 0 : i32
    %c0_i32_0 = arith.constant 0 : i32
    %c0_i32_1 = arith.constant 0 : i32
    return %arg0, %c0_i32, %c0_i32_0 : i32, i32, i32
  }
}

</mosaic_0001>

<llo_original>
// kernel: tpu_custom_call.1
$region0: #{tpu_custom_call.1}
  #allocation0 [shape = 'u32[]', space=smem, size = 0x4, offset = 0x4, fixed_abs, tag = 'smem constant byte address 0x4 - core index']
  #allocation1 [shape = 'u32[144,128]{1,0:T(1,128)}', space=vmem, size = 0x12000, scoped, tag = 'internal scratch']
  %s0 = inlined_call_operand.vmem [shape: bf16[4,2,9,9,4], index: 0, kind: input, shape index: {}]
  %s1 = inlined_call_operand.vmem [shape: bf16[36,8], index: 1, kind: input, shape index: {}]
  %s2 = inlined_call_operand.vmem [shape: f32[128,8], index: 2, kind: output, shape index: {0}]
  %s3 = inlined_call_operand.hbm [shape: f32[1,2,8], index: 3, kind: output, shape index: {1}]
  %4 = xla_tuple %s2, %s3
  %s5 = sld [smem:[#allocation0]]
  $region26: #{tpu_custom_call.1} parent=0
    _
  %s7 = ssub.s32 1, %s5
  %s8 = scalar_select 0, %s7, %s5
  $region1: #{tpu_custom_call.1} parent=0
    #allocation2 [shape = 'u8[1024]{0}', space=vmem, size = 0x400, scoped, tag = 'output window, operand 1, single buffered']
    #allocation3 [shape = 's32[1]{0}', space=sflag, size = 0x4, scoped, tag = 'scoped memory for tpu_custom_call.1']
    %9 = vsyncpa [#allocation3], 0
    // Predicated region
    $region2: #{tpu_custom_call.1} parent=1 // pred_check
      _
    $region3: #{tpu_custom_call.1} parent=1 // pred_check_branch
      %11 = sbr.rel (0) target = $region5
    $region4: #{tpu_custom_call.1} parent=1 // pred_region
      _
    $region5: #{tpu_custom_call.1} parent=1 // pred_fallthru
      _
    // Predicated region
    $region6: #{tpu_custom_call.1} parent=1 // pred_check
      _
    $region7: #{tpu_custom_call.1} parent=1 // pred_check_branch
      %13 = sbr.rel (0) target = $region9
    $region8: #{tpu_custom_call.1} parent=1 // pred_region
      _
    $region9: #{tpu_custom_call.1} parent=1 // pred_fallthru
      _
    %v15 = vld [vmem:[%s0] sm:$0xf]
    %v16 = vld [vmem:[%s0 + $0x8] sm:$0xf]
    %v17 = vld [vmem:[%s0 + $0x10] sm:$0xf]
    %v18 = vld [vmem:[%s0 + $0x18] sm:$0xf]
    %v19 = vld [vmem:[%s0 + $0x20] sm:$0xf]
    %v20 = vld [vmem:[%s0 + $0x28] sm:$0xf]
    %v21 = vld [vmem:[%s0 + $0x30] sm:$0xf]
    %v22 = vld [vmem:[%s0 + $0x38] sm:$0xf]
    %v23 = vld [vmem:[%s0 + $0x48] sm:$0xf]
    %v24 = vld [vmem:[%s0 + $0x50] sm:$0xf]
    %v25 = vld [vmem:[%s0 + $0x58] sm:$0xf]
    %v26 = vld [vmem:[%s0 + $0x60] sm:$0xf]
    %v27 = vld [vmem:[%s0 + $0x68] sm:$0xf]
    %v28 = vld [vmem:[%s0 + $0x70] sm:$0xf]
    %v29 = vld [vmem:[%s0 + $0x78] sm:$0xf]
    %v30 = vld [vmem:[%s0 + $0x80] sm:$0xf]
    %s31 = scalar_lea.vmem %s0, 144
    %v32 = vld [vmem:[%s31] sm:$0xf]
    %v33 = vld [vmem:[%s31 + $0x8] sm:$0xf]
    %v34 = vld [vmem:[%s31 + $0x10] sm:$0xf]
    %v35 = vld [vmem:[%s31 + $0x18] sm:$0xf]
    %v36 = vld [vmem:[%s31 + $0x20] sm:$0xf]
    %v37 = vld [vmem:[%s31 + $0x28] sm:$0xf]
    %v38 = vld [vmem:[%s31 + $0x30] sm:$0xf]
    %v39 = vld [vmem:[%s31 + $0x38] sm:$0xf]
    %v40 = vld [vmem:[%s31 + $0x48] sm:$0xf]
    %v41 = vld [vmem:[%s31 + $0x50] sm:$0xf]
    %v42 = vld [vmem:[%s31 + $0x58] sm:$0xf]
    %v43 = vld [vmem:[%s31 + $0x60] sm:$0xf]
    %v44 = vld [vmem:[%s31 + $0x68] sm:$0xf]
    %v45 = vld [vmem:[%s31 + $0x70] sm:$0xf]
    %v46 = vld [vmem:[%s31 + $0x78] sm:$0xf]
    %v47 = vld [vmem:[%s31 + $0x80] sm:$0xf]
    %v48 = vld [vmem:[%s0 + $0x4] sm:$0x1]
    %v49 = vld [vmem:[%s0 + $0xc] sm:$0x1]
    %v50 = vld [vmem:[%s0 + $0x14] sm:$0x1]
    %v51 = vld [vmem:[%s0 + $0x1c] sm:$0x1]
    %v52 = vld [vmem:[%s0 + $0x24] sm:$0x1]
    %v53 = vld [vmem:[%s0 + $0x2c] sm:$0x1]
    %v54 = vld [vmem:[%s0 + $0x34] sm:$0x1]
    %v55 = vld [vmem:[%s0 + $0x3c] sm:$0x1]
    %v56 = vld [vmem:[%s0 + $0x4c] sm:$0x1]
    %v57 = vld [vmem:[%s0 + $0x54] sm:$0x1]
    %v58 = vld [vmem:[%s0 + $0x5c] sm:$0x1]
    %v59 = vld [vmem:[%s0 + $0x64] sm:$0x1]
    %v60 = vld [vmem:[%s0 + $0x6c] sm:$0x1]
    %v61 = vld [vmem:[%s0 + $0x74] sm:$0x1]
    %v62 = vld [vmem:[%s0 + $0x7c] sm:$0x1]
    %v63 = vld [vmem:[%s0 + $0x84] sm:$0x1]
    %s64 = scalar_lea.vmem %s0, 288
    %v65 = vld [vmem:[%s64] sm:$0xf]
    %v66 = vld [vmem:[%s64 + $0x8] sm:$0xf]
    %v67 = vld [vmem:[%s64 + $0x10] sm:$0xf]
    %v68 = vld [vmem:[%s64 + $0x18] sm:$0xf]
    %v69 = vld [vmem:[%s64 + $0x20] sm:$0xf]
    %v70 = vld [vmem:[%s64 + $0x28] sm:$0xf]
    %v71 = vld [vmem:[%s64 + $0x30] sm:$0xf]
    %v72 = vld [vmem:[%s64 + $0x38] sm:$0xf]
    %v73 = vld [vmem:[%s64 + $0x48] sm:$0xf]
    %v74 = vld [vmem:[%s64 + $0x50] sm:$0xf]
    %v75 = vld [vmem:[%s64 + $0x58] sm:$0xf]
    %v76 = vld [vmem:[%s64 + $0x60] sm:$0xf]
    %v77 = vld [vmem:[%s64 + $0x68] sm:$0xf]
    %v78 = vld [vmem:[%s64 + $0x70] sm:$0xf]
    %v79 = vld [vmem:[%s64 + $0x78] sm:$0xf]
    %v80 = vld [vmem:[%s64 + $0x80] sm:$0xf]
    %s81 = scalar_lea.vmem %s0, 432
    %v82 = vld [vmem:[%s81] sm:$0xf]
    %v83 = vld [vmem:[%s81 + $0x8] sm:$0xf]
    %v84 = vld [vmem:[%s81 + $0x10] sm:$0xf]
    %v85 = vld [vmem:[%s81 + $0x18] sm:$0xf]
    %v86 = vld [vmem:[%s81 + $0x20] sm:$0xf]
    %v87 = vld [vmem:[%s81 + $0x28] sm:$0xf]
    %v88 = vld [vmem:[%s81 + $0x30] sm:$0xf]
    %v89 = vld [vmem:[%s81 + $0x38] sm:$0xf]
    %v90 = vld [vmem:[%s81 + $0x48] sm:$0xf]
    %v91 = vld [vmem:[%s81 + $0x50] sm:$0xf]
    %v92 = vld [vmem:[%s81 + $0x58] sm:$0xf]
    %v93 = vld [vmem:[%s81 + $0x60] sm:$0xf]
    %v94 = vld [vmem:[%s81 + $0x68] sm:$0xf]
    %v95 = vld [vmem:[%s81 + $0x70] sm:$0xf]
    %v96 = vld [vmem:[%s81 + $0x78] sm:$0xf]
    %v97 = vld [vmem:[%s81 + $0x80] sm:$0xf]
    %v98 = vld [vmem:[%s64 + $0x4] sm:$0x1]
    %v99 = vld [vmem:[%s64 + $0xc] sm:$0x1]
    %v100 = vld [vmem:[%s64 + $0x14] sm:$0x1]
    %v101 = vld [vmem:[%s64 + $0x1c] sm:$0x1]
    %v102 = vld [vmem:[%s64 + $0x24] sm:$0x1]
    %v103 = vld [vmem:[%s64 + $0x2c] sm:$0x1]
    %v104 = vld [vmem:[%s64 + $0x34] sm:$0x1]
    %v105 = vld [vmem:[%s64 + $0x3c] sm:$0x1]
    %v106 = vld [vmem:[%s64 + $0x4c] sm:$0x1]
    %v107 = vld [vmem:[%s64 + $0x54] sm:$0x1]
    %v108 = vld [vmem:[%s64 + $0x5c] sm:$0x1]
    %v109 = vld [vmem:[%s64 + $0x64] sm:$0x1]
    %v110 = vld [vmem:[%s64 + $0x6c] sm:$0x1]
    %v111 = vld [vmem:[%s64 + $0x74] sm:$0x1]
    %v112 = vld [vmem:[%s64 + $0x7c] sm:$0x1]
    %v113 = vld [vmem:[%s64 + $0x84] sm:$0x1]
    %s114 = scalar_lea.vmem %s0, 8
    %v115 = vld [vmem:[%s114] sm:$0xf]
    %v116 = vld [vmem:[%s114 + $0x8] sm:$0xf]
    %v117 = vld [vmem:[%s114 + $0x10] sm:$0xf]
    %v118 = vld [vmem:[%s114 + $0x18] sm:$0xf]
    %v119 = vld [vmem:[%s114 + $0x20] sm:$0xf]
    %v120 = vld [vmem:[%s114 + $0x28] sm:$0xf]
    %v121 = vld [vmem:[%s114 + $0x30] sm:$0xf]
    %v122 = vld [vmem:[%s114 + $0x38] sm:$0xf]
    %v123 = vld [vmem:[%s114 + $0x48] sm:$0xf]
    %v124 = vld [vmem:[%s114 + $0x50] sm:$0xf]
    %v125 = vld [vmem:[%s114 + $0x58] sm:$0xf]
    %v126 = vld [vmem:[%s114 + $0x60] sm:$0xf]
    %v127 = vld [vmem:[%s114 + $0x68] sm:$0xf]
    %v128 = vld [vmem:[%s114 + $0x70] sm:$0xf]
    %v129 = vld [vmem:[%s114 + $0x78] sm:$0xf]
    %v130 = vld [vmem:[%s114 + $0x80] sm:$0xf]
    %s131 = scalar_lea.vmem %s0, 152
    %v132 = vld [vmem:[%s131] sm:$0xf]
    %v133 = vld [vmem:[%s131 + $0x8] sm:$0xf]
    %v134 = vld [vmem:[%s131 + $0x10] sm:$0xf]
    %v135 = vld [vmem:[%s131 + $0x18] sm:$0xf]
    %v136 = vld [vmem:[%s131 + $0x20] sm:$0xf]
    %v137 = vld [vmem:[%s131 + $0x28] sm:$0xf]
    %v138 = vld [vmem:[%s131 + $0x30] sm:$0xf]
    %v139 = vld [vmem:[%s131 + $0x38] sm:$0xf]
    %v140 = vld [vmem:[%s131 + $0x48] sm:$0xf]
    %v141 = vld [vmem:[%s131 + $0x50] sm:$0xf]
    %v142 = vld [vmem:[%s131 + $0x58] sm:$0xf]
    %v143 = vld [vmem:[%s131 + $0x60] sm:$0xf]
    %v144 = vld [vmem:[%s131 + $0x68] sm:$0xf]
    %v145 = vld [vmem:[%s131 + $0x70] sm:$0xf]
    %v146 = vld [vmem:[%s131 + $0x78] sm:$0xf]
    %v147 = vld [vmem:[%s131 + $0x80] sm:$0xf]
    %v148 = vld [vmem:[%s114 + $0x4] sm:$0x1]
    %v149 = vld [vmem:[%s114 + $0xc] sm:$0x1]
    %v150 = vld [vmem:[%s114 + $0x14] sm:$0x1]
    %v151 = vld [vmem:[%s114 + $0x1c] sm:$0x1]
    %v152 = vld [vmem:[%s114 + $0x24] sm:$0x1]
    %v153 = vld [vmem:[%s114 + $0x2c] sm:$0x1]
    %v154 = vld [vmem:[%s114 + $0x34] sm:$0x1]
    %v155 = vld [vmem:[%s114 + $0x3c] sm:$0x1]
    %v156 = vld [vmem:[%s114 + $0x4c] sm:$0x1]
    %v157 = vld [vmem:[%s114 + $0x54] sm:$0x1]
    %v158 = vld [vmem:[%s114 + $0x5c] sm:$0x1]
    %v159 = vld [vmem:[%s114 + $0x64] sm:$0x1]
    %v160 = vld [vmem:[%s114 + $0x6c] sm:$0x1]
    %v161 = vld [vmem:[%s114 + $0x74] sm:$0x1]
    %v162 = vld [vmem:[%s114 + $0x7c] sm:$0x1]
    %v163 = vld [vmem:[%s114 + $0x84] sm:$0x1]
    %v180 = vunpack.c.l.b16 %v32
    %v181 = vunpack.c.l.b16 %v33
    %v182 = vunpack.c.l.b16 %v34
    %v183 = vunpack.c.l.b16 %v35
    %v184 = vunpack.c.l.b16 %v36
    %v185 = vunpack.c.l.b16 %v37
    %v186 = vunpack.c.l.b16 %v38
    %v187 = vunpack.c.l.b16 %v39
    %v188 = vunpack.c.l.b16 %v40
    %v189 = vunpack.c.l.b16 %v41
    %v190 = vunpack.c.l.b16 %v42
    %v191 = vunpack.c.l.b16 %v43
    %v192 = vunpack.c.l.b16 %v44
    %v193 = vunpack.c.l.b16 %v45
    %v194 = vunpack.c.l.b16 %v46
    %v195 = vunpack.c.l.b16 %v47
    %v196 = vpack.c.b16 %v180, %v180
    %v197 = vpack.c.b16 %v181, %v181
    %v198 = vpack.c.b16 %v182, %v182
    %v199 = vpack.c.b16 %v183, %v183
    %v200 = vpack.c.b16 %v184, %v184
    %v201 = vpack.c.b16 %v185, %v185
    %v202 = vpack.c.b16 %v186, %v186
    %v203 = vpack.c.b16 %v187, %v187
    %v204 = vpack.c.b16 %v188, %v188
    %v205 = vpack.c.b16 %v189, %v189
    %v206 = vpack.c.b16 %v190, %v190
    %v207 = vpack.c.b16 %v191, %v191
    %v208 = vpack.c.b16 %v192, %v192
    %v209 = vpack.c.b16 %v193, %v193
    %v210 = vpack.c.b16 %v194, %v194
    %v211 = vpack.c.b16 %v195, %v195
    %212 = vrot.lane.b32.xlu0 %v196, 4
    %v213 = vpop.permute.xlu0 %212
    %214 = vrot.lane.b32.xlu0 %v197, 4
    %v215 = vpop.permute.xlu0 %214
    %216 = vrot.lane.b32.xlu0 %v198, 4
    %v217 = vpop.permute.xlu0 %216
    %218 = vrot.lane.b32.xlu0 %v199, 4
    %v219 = vpop.permute.xlu0 %218
    %220 = vrot.lane.b32.xlu0 %v200, 4
    %v221 = vpop.permute.xlu0 %220
    %222 = vrot.lane.b32.xlu0 %v201, 4
    %v223 = vpop.permute.xlu0 %222
    %224 = vrot.lane.b32.xlu0 %v202, 4
    %v225 = vpop.permute.xlu0 %224
    %226 = vrot.lane.b32.xlu0 %v203, 4
    %v227 = vpop.permute.xlu0 %226
    %228 = vrot.lane.b32.xlu0 %v204, 4
    %v229 = vpop.permute.xlu0 %228
    %230 = vrot.lane.b32.xlu0 %v205, 4
    %v231 = vpop.permute.xlu0 %230
    %232 = vrot.lane.b32.xlu0 %v206, 4
    %v233 = vpop.permute.xlu0 %232
    %234 = vrot.lane.b32.xlu0 %v207, 4
    %v235 = vpop.permute.xlu0 %234
    %236 = vrot.lane.b32.xlu0 %v208, 4
    %v237 = vpop.permute.xlu0 %236
    %238 = vrot.lane.b32.xlu0 %v209, 4
    %v239 = vpop.permute.xlu0 %238
    %240 = vrot.lane.b32.xlu0 %v210, 4
    %v241 = vpop.permute.xlu0 %240
    %242 = vrot.lane.b32.xlu0 %v211, 4
    %v243 = vpop.permute.xlu0 %242
    %v276 = vunpack.c.l.b16 %v15
    %v277 = vunpack.c.l.b16 %v48
    %v278 = vunpack.c.l.b16 %v16
    %v279 = vunpack.c.l.b16 %v49
    %v280 = vunpack.c.l.b16 %v17
    %v281 = vunpack.c.l.b16 %v50
    %v282 = vunpack.c.l.b16 %v18
    %v283 = vunpack.c.l.b16 %v51
    %v284 = vunpack.c.l.b16 %v19
    %v285 = vunpack.c.l.b16 %v52
    %v286 = vunpack.c.l.b16 %v20
    %v287 = vunpack.c.l.b16 %v53
    %v288 = vunpack.c.l.b16 %v21
    %v289 = vunpack.c.l.b16 %v54
    %v290 = vunpack.c.l.b16 %v22
    %v291 = vunpack.c.l.b16 %v55
    %v292 = vunpack.c.l.b16 %v23
    %v293 = vunpack.c.l.b16 %v56
    %v294 = vunpack.c.l.b16 %v24
    %v295 = vunpack.c.l.b16 %v57
    %v296 = vunpack.c.l.b16 %v25
    %v297 = vunpack.c.l.b16 %v58
    %v298 = vunpack.c.l.b16 %v26
    %v299 = vunpack.c.l.b16 %v59
    %v300 = vunpack.c.l.b16 %v27
    %v301 = vunpack.c.l.b16 %v60
    %v302 = vunpack.c.l.b16 %v28
    %v303 = vunpack.c.l.b16 %v61
    %v304 = vunpack.c.l.b16 %v29
    %v305 = vunpack.c.l.b16 %v62
    %v306 = vunpack.c.l.b16 %v30
    %v307 = vunpack.c.l.b16 %v63
    %v308 = vpack.c.b16 %v277, %v276
    %v309 = vpack.c.b16 %v279, %v278
    %v310 = vpack.c.b16 %v281, %v280
    %v311 = vpack.c.b16 %v283, %v282
    %v312 = vpack.c.b16 %v285, %v284
    %v313 = vpack.c.b16 %v287, %v286
    %v314 = vpack.c.b16 %v289, %v288
    %v315 = vpack.c.b16 %v291, %v290
    %v316 = vpack.c.b16 %v293, %v292
    %v317 = vpack.c.b16 %v295, %v294
    %v318 = vpack.c.b16 %v297, %v296
    %v319 = vpack.c.b16 %v299, %v298
    %v320 = vpack.c.b16 %v301, %v300
    %v321 = vpack.c.b16 %v303, %v302
    %v322 = vpack.c.b16 %v305, %v304
    %v323 = vpack.c.b16 %v307, %v306
    %v325 = vshrl.u32 %v308, 16
    %v327 = vshll.u32 %v308, 16
    %v329 = vrot.slane %v327, 1
    %v330 = vor.u32 %v325, %v329
    %v332 = vshrl.u32 %v309, 16
    %v334 = vshll.u32 %v309, 16
    %v336 = vrot.slane %v334, 1
    %v337 = vor.u32 %v332, %v336
    %v339 = vshrl.u32 %v310, 16
    %v341 = vshll.u32 %v310, 16
    %v343 = vrot.slane %v341, 1
    %v344 = vor.u32 %v339, %v343
    %v346 = vshrl.u32 %v311, 16
    %v348 = vshll.u32 %v311, 16
    %v350 = vrot.slane %v348, 1
    %v351 = vor.u32 %v346, %v350
    %v353 = vshrl.u32 %v312, 16
    %v355 = vshll.u32 %v312, 16
    %v357 = vrot.slane %v355, 1
    %v358 = vor.u32 %v353, %v357
    %v360 = vshrl.u32 %v313, 16
    %v362 = vshll.u32 %v313, 16
    %v364 = vrot.slane %v362, 1
    %v365 = vor.u32 %v360, %v364
    %v367 = vshrl.u32 %v314, 16
    %v369 = vshll.u32 %v314, 16
    %v371 = vrot.slane %v369, 1
    %v372 = vor.u32 %v367, %v371
    %v374 = vshrl.u32 %v315, 16
    %v376 = vshll.u32 %v315, 16
    %v378 = vrot.slane %v376, 1
    %v379 = vor.u32 %v374, %v378
    %v381 = vshrl.u32 %v316, 16
    %v383 = vshll.u32 %v316, 16
    %v385 = vrot.slane %v383, 1
    %v386 = vor.u32 %v381, %v385
    %v388 = vshrl.u32 %v317, 16
    %v390 = vshll.u32 %v317, 16
    %v392 = vrot.slane %v390, 1
    %v393 = vor.u32 %v388, %v392
    %v395 = vshrl.u32 %v318, 16
    %v397 = vshll.u32 %v318, 16
    %v399 = vrot.slane %v397, 1
    %v400 = vor.u32 %v395, %v399
    %v402 = vshrl.u32 %v319, 16
    %v404 = vshll.u32 %v319, 16
    %v406 = vrot.slane %v404, 1
    %v407 = vor.u32 %v402, %v406
    %v409 = vshrl.u32 %v320, 16
    %v411 = vshll.u32 %v320, 16
    %v413 = vrot.slane %v411, 1
    %v414 = vor.u32 %v409, %v413
    %v416 = vshrl.u32 %v321, 16
    %v418 = vshll.u32 %v321, 16
    %v420 = vrot.slane %v418, 1
    %v421 = vor.u32 %v416, %v420
    %v423 = vshrl.u32 %v322, 16
    %v425 = vshll.u32 %v322, 16
    %v427 = vrot.slane %v425, 1
    %v428 = vor.u32 %v423, %v427
    %v430 = vshrl.u32 %v323, 16
    %v432 = vshll.u32 %v323, 16
    %v434 = vrot.slane %v432, 1
    %v435 = vor.u32 %v430, %v434
    %436 = vrot.lane.b32.xlu0 %v330, 8
    %v437 = vpop.permute.xlu0 %436
    %438 = vrot.lane.b32.xlu0 %v337, 8
    %v439 = vpop.permute.xlu0 %438
    %440 = vrot.lane.b32.xlu0 %v344, 8
    %v441 = vpop.permute.xlu0 %440
    %442 = vrot.lane.b32.xlu0 %v351, 8
    %v443 = vpop.permute.xlu0 %442
    %444 = vrot.lane.b32.xlu0 %v358, 8
    %v445 = vpop.permute.xlu0 %444
    %446 = vrot.lane.b32.xlu0 %v365, 8
    %v447 = vpop.permute.xlu0 %446
    %448 = vrot.lane.b32.xlu0 %v372, 8
    %v449 = vpop.permute.xlu0 %448
    %450 = vrot.lane.b32.xlu0 %v379, 8
    %v451 = vpop.permute.xlu0 %450
    %452 = vrot.lane.b32.xlu0 %v386, 8
    %v453 = vpop.permute.xlu0 %452
    %454 = vrot.lane.b32.xlu0 %v393, 8
    %v455 = vpop.permute.xlu0 %454
    %456 = vrot.lane.b32.xlu0 %v400, 8
    %v457 = vpop.permute.xlu0 %456
    %458 = vrot.lane.b32.xlu0 %v407, 8
    %v459 = vpop.permute.xlu0 %458
    %460 = vrot.lane.b32.xlu0 %v414, 8
    %v461 = vpop.permute.xlu0 %460
    %462 = vrot.lane.b32.xlu0 %v421, 8
    %v463 = vpop.permute.xlu0 %462
    %464 = vrot.lane.b32.xlu0 %v428, 8
    %v465 = vpop.permute.xlu0 %464
    %466 = vrot.lane.b32.xlu0 %v435, 8
    %v467 = vpop.permute.xlu0 %466
    %v484 = vunpack.c.l.b16 %v65
    %v485 = vunpack.c.l.b16 %v66
    %v486 = vunpack.c.l.b16 %v67
    %v487 = vunpack.c.l.b16 %v68
    %v488 = vunpack.c.l.b16 %v69
    %v489 = vunpack.c.l.b16 %v70
    %v490 = vunpack.c.l.b16 %v71
    %v491 = vunpack.c.l.b16 %v72
    %v492 = vunpack.c.l.b16 %v73
    %v493 = vunpack.c.l.b16 %v74
    %v494 = vunpack.c.l.b16 %v75
    %v495 = vunpack.c.l.b16 %v76
    %v496 = vunpack.c.l.b16 %v77
    %v497 = vunpack.c.l.b16 %v78
    %v498 = vunpack.c.l.b16 %v79
    %v499 = vunpack.c.l.b16 %v80
    %v500 = vpack.c.b16 %v484, %v484
    %v501 = vpack.c.b16 %v485, %v485
    %v502 = vpack.c.b16 %v486, %v486
    %v503 = vpack.c.b16 %v487, %v487
    %v504 = vpack.c.b16 %v488, %v488
    %v505 = vpack.c.b16 %v489, %v489
    %v506 = vpack.c.b16 %v490, %v490
    %v507 = vpack.c.b16 %v491, %v491
    %v508 = vpack.c.b16 %v492, %v492
    %v509 = vpack.c.b16 %v493, %v493
    %v510 = vpack.c.b16 %v494, %v494
    %v511 = vpack.c.b16 %v495, %v495
    %v512 = vpack.c.b16 %v496, %v496
    %v513 = vpack.c.b16 %v497, %v497
    %v514 = vpack.c.b16 %v498, %v498
    %v515 = vpack.c.b16 %v499, %v499
    %516 = vrot.lane.b32.xlu0 %v500, 12
    %v517 = vpop.permute.xlu0 %516
    %518 = vrot.lane.b32.xlu0 %v501, 12
    %v519 = vpop.permute.xlu0 %518
    %520 = vrot.lane.b32.xlu0 %v502, 12
    %v521 = vpop.permute.xlu0 %520
    %522 = vrot.lane.b32.xlu0 %v503, 12
    %v523 = vpop.permute.xlu0 %522
    %524 = vrot.lane.b32.xlu0 %v504, 12
    %v525 = vpop.permute.xlu0 %524
    %526 = vrot.lane.b32.xlu0 %v505, 12
    %v527 = vpop.permute.xlu0 %526
    %528 = vrot.lane.b32.xlu0 %v506, 12
    %v529 = vpop.permute.xlu0 %528
    %530 = vrot.lane.b32.xlu0 %v507, 12
    %v531 = vpop.permute.xlu0 %530
    %532 = vrot.lane.b32.xlu0 %v508, 12
    %v533 = vpop.permute.xlu0 %532
    %534 = vrot.lane.b32.xlu0 %v509, 12
    %v535 = vpop.permute.xlu0 %534
    %536 = vrot.lane.b32.xlu0 %v510, 12
    %v537 = vpop.permute.xlu0 %536
    %538 = vrot.lane.b32.xlu0 %v511, 12
    %v539 = vpop.permute.xlu0 %538
    %540 = vrot.lane.b32.xlu0 %v512, 12
    %v541 = vpop.permute.xlu0 %540
    %542 = vrot.lane.b32.xlu0 %v513, 12
    %v543 = vpop.permute.xlu0 %542
    %544 = vrot.lane.b32.xlu0 %v514, 12
    %v545 = vpop.permute.xlu0 %544
    %546 = vrot.lane.b32.xlu0 %v515, 12
    %v547 = vpop.permute.xlu0 %546
    %v564 = vunpack.c.l.b16 %v82
    %v565 = vunpack.c.l.b16 %v83
    %v566 = vunpack.c.l.b16 %v84
    %v567 = vunpack.c.l.b16 %v85
    %v568 = vunpack.c.l.b16 %v86
    %v569 = vunpack.c.l.b16 %v87
    %v570 = vunpack.c.l.b16 %v88
    %v571 = vunpack.c.l.b16 %v89
    %v572 = vunpack.c.l.b16 %v90
    %v573 = vunpack.c.l.b16 %v91
    %v574 = vunpack.c.l.b16 %v92
    %v575 = vunpack.c.l.b16 %v93
    %v576 = vunpack.c.l.b16 %v94
    %v577 = vunpack.c.l.b16 %v95
    %v578 = vunpack.c.l.b16 %v96
    %v579 = vunpack.c.l.b16 %v97
    %v580 = vpack.c.b16 %v564, %v564
    %v581 = vpack.c.b16 %v565, %v565
    %v582 = vpack.c.b16 %v566, %v566
    %v583 = vpack.c.b16 %v567, %v567
    %v584 = vpack.c.b16 %v568, %v568
    %v585 = vpack.c.b16 %v569, %v569
    %v586 = vpack.c.b16 %v570, %v570
    %v587 = vpack.c.b16 %v571, %v571
    %v588 = vpack.c.b16 %v572, %v572
    %v589 = vpack.c.b16 %v573, %v573
    %v590 = vpack.c.b16 %v574, %v574
    %v591 = vpack.c.b16 %v575, %v575
    %v592 = vpack.c.b16 %v576, %v576
    %v593 = vpack.c.b16 %v577, %v577
    %v594 = vpack.c.b16 %v578, %v578
    %v595 = vpack.c.b16 %v579, %v579
    %596 = vrot.lane.b32.xlu0 %v580, 16
    %v597 = vpop.permute.xlu0 %596
    %598 = vrot.lane.b32.xlu0 %v581, 16
    %v599 = vpop.permute.xlu0 %598
    %600 = vrot.lane.b32.xlu0 %v582, 16
    %v601 = vpop.permute.xlu0 %600
    %602 = vrot.lane.b32.xlu0 %v583, 16
    %v603 = vpop.permute.xlu0 %602
    %604 = vrot.lane.b32.xlu0 %v584, 16
    %v605 = vpop.permute.xlu0 %604
    %606 = vrot.lane.b32.xlu0 %v585, 16
    %v607 = vpop.permute.xlu0 %606
    %608 = vrot.lane.b32.xlu0 %v586, 16
    %v609 = vpop.permute.xlu0 %608
    %610 = vrot.lane.b32.xlu0 %v587, 16
    %v611 = vpop.permute.xlu0 %610
    %612 = vrot.lane.b32.xlu0 %v588, 16
    %v613 = vpop.permute.xlu0 %612
    %614 = vrot.lane.b32.xlu0 %v589, 16
    %v615 = vpop.permute.xlu0 %614
    %616 = vrot.lane.b32.xlu0 %v590, 16
    %v617 = vpop.permute.xlu0 %616
    %618 = vrot.lane.b32.xlu0 %v591, 16
    %v619 = vpop.permute.xlu0 %618
    %620 = vrot.lane.b32.xlu0 %v592, 16
    %v621 = vpop.permute.xlu0 %620
    %622 = vrot.lane.b32.xlu0 %v593, 16
    %v623 = vpop.permute.xlu0 %622
    %624 = vrot.lane.b32.xlu0 %v594, 16
    %v625 = vpop.permute.xlu0 %624
    %626 = vrot.lane.b32.xlu0 %v595, 16
    %v627 = vpop.permute.xlu0 %626
    %v644 = vunpack.c.l.b16 %v98
    %v645 = vunpack.c.l.b16 %v99
    %v646 = vunpack.c.l.b16 %v100
    %v647 = vunpack.c.l.b16 %v101
    %v648 = vunpack.c.l.b16 %v102
    %v649 = vunpack.c.l.b16 %v103
    %v650 = vunpack.c.l.b16 %v104
    %v651 = vunpack.c.l.b16 %v105
    %v652 = vunpack.c.l.b16 %v106
    %v653 = vunpack.c.l.b16 %v107
    %v654 = vunpack.c.l.b16 %v108
    %v655 = vunpack.c.l.b16 %v109
    %v656 = vunpack.c.l.b16 %v110
    %v657 = vunpack.c.l.b16 %v111
    %v658 = vunpack.c.l.b16 %v112
    %v659 = vunpack.c.l.b16 %v113
    %v660 = vpack.c.b16 %v644, %v484
    %v661 = vpack.c.b16 %v645, %v485
    %v662 = vpack.c.b16 %v646, %v486
    %v663 = vpack.c.b16 %v647, %v487
    %v664 = vpack.c.b16 %v648, %v488
    %v665 = vpack.c.b16 %v649, %v489
    %v666 = vpack.c.b16 %v650, %v490
    %v667 = vpack.c.b16 %v651, %v491
    %v668 = vpack.c.b16 %v652, %v492
    %v669 = vpack.c.b16 %v653, %v493
    %v670 = vpack.c.b16 %v654, %v494
    %v671 = vpack.c.b16 %v655, %v495
    %v672 = vpack.c.b16 %v656, %v496
    %v673 = vpack.c.b16 %v657, %v497
    %v674 = vpack.c.b16 %v658, %v498
    %v675 = vpack.c.b16 %v659, %v499
    %v677 = vshrl.u32 %v660, 16
    %v679 = vshll.u32 %v660, 16
    %v681 = vrot.slane %v679, 1
    %v682 = vor.u32 %v677, %v681
    %v684 = vshrl.u32 %v661, 16
    %v686 = vshll.u32 %v661, 16
    %v688 = vrot.slane %v686, 1
    %v689 = vor.u32 %v684, %v688
    %v691 = vshrl.u32 %v662, 16
    %v693 = vshll.u32 %v662, 16
    %v695 = vrot.slane %v693, 1
    %v696 = vor.u32 %v691, %v695
    %v698 = vshrl.u32 %v663, 16
    %v700 = vshll.u32 %v663, 16
    %v702 = vrot.slane %v700, 1
    %v703 = vor.u32 %v698, %v702
    %v705 = vshrl.u32 %v664, 16
    %v707 = vshll.u32 %v664, 16
    %v709 = vrot.slane %v707, 1
    %v710 = vor.u32 %v705, %v709
    %v712 = vshrl.u32 %v665, 16
    %v714 = vshll.u32 %v665, 16
    %v716 = vrot.slane %v714, 1
    %v717 = vor.u32 %v712, %v716
    %v719 = vshrl.u32 %v666, 16
    %v721 = vshll.u32 %v666, 16
    %v723 = vrot.slane %v721, 1
    %v724 = vor.u32 %v719, %v723
    %v726 = vshrl.u32 %v667, 16
    %v728 = vshll.u32 %v667, 16
    %v730 = vrot.slane %v728, 1
    %v731 = vor.u32 %v726, %v730
    %v733 = vshrl.u32 %v668, 16
    %v735 = vshll.u32 %v668, 16
    %v737 = vrot.slane %v735, 1
    %v738 = vor.u32 %v733, %v737
    %v740 = vshrl.u32 %v669, 16
    %v742 = vshll.u32 %v669, 16
    %v744 = vrot.slane %v742, 1
    %v745 = vor.u32 %v740, %v744
    %v747 = vshrl.u32 %v670, 16
    %v749 = vshll.u32 %v670, 16
    %v751 = vrot.slane %v749, 1
    %v752 = vor.u32 %v747, %v751
    %v754 = vshrl.u32 %v671, 16
    %v756 = vshll.u32 %v671, 16
    %v758 = vrot.slane %v756, 1
    %v759 = vor.u32 %v754, %v758
    %v761 = vshrl.u32 %v672, 16
    %v763 = vshll.u32 %v672, 16
    %v765 = vrot.slane %v763, 1
    %v766 = vor.u32 %v761, %v765
    %v768 = vshrl.u32 %v673, 16
    %v770 = vshll.u32 %v673, 16
    %v772 = vrot.slane %v770, 1
    %v773 = vor.u32 %v768, %v772
    %v775 = vshrl.u32 %v674, 16
    %v777 = vshll.u32 %v674, 16
    %v779 = vrot.slane %v777, 1
    %v780 = vor.u32 %v775, %v779
    %v782 = vshrl.u32 %v675, 16
    %v784 = vshll.u32 %v675, 16
    %v786 = vrot.slane %v784, 1
    %v787 = vor.u32 %v782, %v786
    %788 = vrot.lane.b32.xlu0 %v682, 20
    %v789 = vpop.permute.xlu0 %788
    %790 = vrot.lane.b32.xlu0 %v689, 20
    %v791 = vpop.permute.xlu0 %790
    %792 = vrot.lane.b32.xlu0 %v696, 20
    %v793 = vpop.permute.xlu0 %792
    %794 = vrot.lane.b32.xlu0 %v703, 20
    %v795 = vpop.permute.xlu0 %794
    %796 = vrot.lane.b32.xlu0 %v710, 20
    %v797 = vpop.permute.xlu0 %796
    %798 = vrot.lane.b32.xlu0 %v717, 20
    %v799 = vpop.permute.xlu0 %798
    %800 = vrot.lane.b32.xlu0 %v724, 20
    %v801 = vpop.permute.xlu0 %800
    %802 = vrot.lane.b32.xlu0 %v731, 20
    %v803 = vpop.permute.xlu0 %802
    %804 = vrot.lane.b32.xlu0 %v738, 20
    %v805 = vpop.permute.xlu0 %804
    %806 = vrot.lane.b32.xlu0 %v745, 20
    %v807 = vpop.permute.xlu0 %806
    %808 = vrot.lane.b32.xlu0 %v752, 20
    %v809 = vpop.permute.xlu0 %808
    %810 = vrot.lane.b32.xlu0 %v759, 20
    %v811 = vpop.permute.xlu0 %810
    %812 = vrot.lane.b32.xlu0 %v766, 20
    %v813 = vpop.permute.xlu0 %812
    %814 = vrot.lane.b32.xlu0 %v773, 20
    %v815 = vpop.permute.xlu0 %814
    %816 = vrot.lane.b32.xlu0 %v780, 20
    %v817 = vpop.permute.xlu0 %816
    %818 = vrot.lane.b32.xlu0 %v787, 20
    %v819 = vpop.permute.xlu0 %818
    %v836 = vunpack.c.l.b16 %v115
    %v837 = vunpack.c.l.b16 %v116
    %v838 = vunpack.c.l.b16 %v117
    %v839 = vunpack.c.l.b16 %v118
    %v840 = vunpack.c.l.b16 %v119
    %v841 = vunpack.c.l.b16 %v120
    %v842 = vunpack.c.l.b16 %v121
    %v843 = vunpack.c.l.b16 %v122
    %v844 = vunpack.c.l.b16 %v123
    %v845 = vunpack.c.l.b16 %v124
    %v846 = vunpack.c.l.b16 %v125
    %v847 = vunpack.c.l.b16 %v126
    %v848 = vunpack.c.l.b16 %v127
    %v849 = vunpack.c.l.b16 %v128
    %v850 = vunpack.c.l.b16 %v129
    %v851 = vunpack.c.l.b16 %v130
    %v852 = vpack.c.b16 %v836, %v836
    %v853 = vpack.c.b16 %v837, %v837
    %v854 = vpack.c.b16 %v838, %v838
    %v855 = vpack.c.b16 %v839, %v839
    %v856 = vpack.c.b16 %v840, %v840
    %v857 = vpack.c.b16 %v841, %v841
    %v858 = vpack.c.b16 %v842, %v842
    %v859 = vpack.c.b16 %v843, %v843
    %v860 = vpack.c.b16 %v844, %v844
    %v861 = vpack.c.b16 %v845, %v845
    %v862 = vpack.c.b16 %v846, %v846
    %v863 = vpack.c.b16 %v847, %v847
    %v864 = vpack.c.b16 %v848, %v848
    %v865 = vpack.c.b16 %v849, %v849
    %v866 = vpack.c.b16 %v850, %v850
    %v867 = vpack.c.b16 %v851, %v851
    %868 = vrot.lane.b32.xlu0 %v852, 24
    %v869 = vpop.permute.xlu0 %868
    %870 = vrot.lane.b32.xlu0 %v853, 24
    %v871 = vpop.permute.xlu0 %870
    %872 = vrot.lane.b32.xlu0 %v854, 24
    %v873 = vpop.permute.xlu0 %872
    %874 = vrot.lane.b32.xlu0 %v855, 24
    %v875 = vpop.permute.xlu0 %874
    %876 = vrot.lane.b32.xlu0 %v856, 24
    %v877 = vpop.permute.xlu0 %876
    %878 = vrot.lane.b32.xlu0 %v857, 24
    %v879 = vpop.permute.xlu0 %878
    %880 = vrot.lane.b32.xlu0 %v858, 24
    %v881 = vpop.permute.xlu0 %880
    %882 = vrot.lane.b32.xlu0 %v859, 24
    %v883 = vpop.permute.xlu0 %882
    %884 = vrot.lane.b32.xlu0 %v860, 24
    %v885 = vpop.permute.xlu0 %884
    %886 = vrot.lane.b32.xlu0 %v861, 24
    %v887 = vpop.permute.xlu0 %886
    %888 = vrot.lane.b32.xlu0 %v862, 24
    %v889 = vpop.permute.xlu0 %888
    %890 = vrot.lane.b32.xlu0 %v863, 24
    %v891 = vpop.permute.xlu0 %890
    %892 = vrot.lane.b32.xlu0 %v864, 24
    %v893 = vpop.permute.xlu0 %892
    %894 = vrot.lane.b32.xlu0 %v865, 24
    %v895 = vpop.permute.xlu0 %894
    %896 = vrot.lane.b32.xlu0 %v866, 24
    %v897 = vpop.permute.xlu0 %896
    %898 = vrot.lane.b32.xlu0 %v867, 24
    %v899 = vpop.permute.xlu0 %898
    %v916 = vunpack.c.l.b16 %v132
    %v917 = vunpack.c.l.b16 %v133
    %v918 = vunpack.c.l.b16 %v134
    %v919 = vunpack.c.l.b16 %v135
    %v920 = vunpack.c.l.b16 %v136
    %v921 = vunpack.c.l.b16 %v137
    %v922 = vunpack.c.l.b16 %v138
    %v923 = vunpack.c.l.b16 %v139
    %v924 = vunpack.c.l.b16 %v140
    %v925 = vunpack.c.l.b16 %v141
    %v926 = vunpack.c.l.b16 %v142
    %v927 = vunpack.c.l.b16 %v143
    %v928 = vunpack.c.l.b16 %v144
    %v929 = vunpack.c.l.b16 %v145
    %v930 = vunpack.c.l.b16 %v146
    %v931 = vunpack.c.l.b16 %v147
    %v932 = vpack.c.b16 %v916, %v916
    %v933 = vpack.c.b16 %v917, %v917
    %v934 = vpack.c.b16 %v918, %v918
    %v935 = vpack.c.b16 %v919, %v919
    %v936 = vpack.c.b16 %v920, %v920
    %v937 = vpack.c.b16 %v921, %v921
    %v938 = vpack.c.b16 %v922, %v922
    %v939 = vpack.c.b16 %v923, %v923
    %v940 = vpack.c.b16 %v924, %v924
    %v941 = vpack.c.b16 %v925, %v925
    %v942 = vpack.c.b16 %v926, %v926
    %v943 = vpack.c.b16 %v927, %v927
    %v944 = vpack.c.b16 %v928, %v928
    %v945 = vpack.c.b16 %v929, %v929
    %v946 = vpack.c.b16 %v930, %v930
    %v947 = vpack.c.b16 %v931, %v931
    %948 = vrot.lane.b32.xlu0 %v932, 28
    %v949 = vpop.permute.xlu0 %948
    %950 = vrot.lane.b32.xlu0 %v933, 28
    %v951 = vpop.permute.xlu0 %950
    %952 = vrot.lane.b32.xlu0 %v934, 28
    %v953 = vpop.permute.xlu0 %952
    %954 = vrot.lane.b32.xlu0 %v935, 28
    %v955 = vpop.permute.xlu0 %954
    %956 = vrot.lane.b32.xlu0 %v936, 28
    %v957 = vpop.permute.xlu0 %956
    %958 = vrot.lane.b32.xlu0 %v937, 28
    %v959 = vpop.permute.xlu0 %958
    %960 = vrot.lane.b32.xlu0 %v938, 28
    %v961 = vpop.permute.xlu0 %960
    %962 = vrot.lane.b32.xlu0 %v939, 28
    %v963 = vpop.permute.xlu0 %962
    %964 = vrot.lane.b32.xlu0 %v940, 28
    %v965 = vpop.permute.xlu0 %964
    %966 = vrot.lane.b32.xlu0 %v941, 28
    %v967 = vpop.permute.xlu0 %966
    %968 = vrot.lane.b32.xlu0 %v942, 28
    %v969 = vpop.permute.xlu0 %968
    %970 = vrot.lane.b32.xlu0 %v943, 28
    %v971 = vpop.permute.xlu0 %970
    %972 = vrot.lane.b32.xlu0 %v944, 28
    %v973 = vpop.permute.xlu0 %972
    %974 = vrot.lane.b32.xlu0 %v945, 28
    %v975 = vpop.permute.xlu0 %974
    %976 = vrot.lane.b32.xlu0 %v946, 28
    %v977 = vpop.permute.xlu0 %976
    %978 = vrot.lane.b32.xlu0 %v947, 28
    %v979 = vpop.permute.xlu0 %978
    %v996 = vunpack.c.l.b16 %v148
    %v997 = vunpack.c.l.b16 %v149
    %v998 = vunpack.c.l.b16 %v150
    %v999 = vunpack.c.l.b16 %v151
    %v1000 = vunpack.c.l.b16 %v152
    %v1001 = vunpack.c.l.b16 %v153
    %v1002 = vunpack.c.l.b16 %v154
    %v1003 = vunpack.c.l.b16 %v155
    %v1004 = vunpack.c.l.b16 %v156
    %v1005 = vunpack.c.l.b16 %v157
    %v1006 = vunpack.c.l.b16 %v158
    %v1007 = vunpack.c.l.b16 %v159
    %v1008 = vunpack.c.l.b16 %v160
    %v1009 = vunpack.c.l.b16 %v161
    %v1010 = vunpack.c.l.b16 %v162
    %v1011 = vunpack.c.l.b16 %v163
    %v1012 = vpack.c.b16 %v996, %v836
    %v1013 = vpack.c.b16 %v997, %v837
    %v1014 = vpack.c.b16 %v998, %v838
    %v1015 = vpack.c.b16 %v999, %v839
    %v1016 = vpack.c.b16 %v1000, %v840
    %v1017 = vpack.c.b16 %v1001, %v841
    %v1018 = vpack.c.b16 %v1002, %v842
    %v1019 = vpack.c.b16 %v1003, %v843
    %v1020 = vpack.c.b16 %v1004, %v844
    %v1021 = vpack.c.b16 %v1005, %v845
    %v1022 = vpack.c.b16 %v1006, %v846
    %v1023 = vpack.c.b16 %v1007, %v847
    %v1024 = vpack.c.b16 %v1008, %v848
    %v1025 = vpack.c.b16 %v1009, %v849
    %v1026 = vpack.c.b16 %v1010, %v850
    %v1027 = vpack.c.b16 %v1011, %v851
    %v1029 = vshrl.u32 %v1012, 16
    %v1031 = vshll.u32 %v1012, 16
    %v1033 = vrot.slane %v1031, 1
    %v1034 = vor.u32 %v1029, %v1033
    %v1036 = vshrl.u32 %v1013, 16
    %v1038 = vshll.u32 %v1013, 16
    %v1040 = vrot.slane %v1038, 1
    %v1041 = vor.u32 %v1036, %v1040
    %v1043 = vshrl.u32 %v1014, 16
    %v1045 = vshll.u32 %v1014, 16
    %v1047 = vrot.slane %v1045, 1
    %v1048 = vor.u32 %v1043, %v1047
    %v1050 = vshrl.u32 %v1015, 16
    %v1052 = vshll.u32 %v1015, 16
    %v1054 = vrot.slane %v1052, 1
    %v1055 = vor.u32 %v1050, %v1054
    %v1057 = vshrl.u32 %v1016, 16
    %v1059 = vshll.u32 %v1016, 16
    %v1061 = vrot.slane %v1059, 1
    %v1062 = vor.u32 %v1057, %v1061
    %v1064 = vshrl.u32 %v1017, 16
    %v1066 = vshll.u32 %v1017, 16
    %v1068 = vrot.slane %v1066, 1
    %v1069 = vor.u32 %v1064, %v1068
    %v1071 = vshrl.u32 %v1018, 16
    %v1073 = vshll.u32 %v1018, 16
    %v1075 = vrot.slane %v1073, 1
    %v1076 = vor.u32 %v1071, %v1075
    %v1078 = vshrl.u32 %v1019, 16
    %v1080 = vshll.u32 %v1019, 16
    %v1082 = vrot.slane %v1080, 1
    %v1083 = vor.u32 %v1078, %v1082
    %v1085 = vshrl.u32 %v1020, 16
    %v1087 = vshll.u32 %v1020, 16
    %v1089 = vrot.slane %v1087, 1
    %v1090 = vor.u32 %v1085, %v1089
    %v1092 = vshrl.u32 %v1021, 16
    %v1094 = vshll.u32 %v1021, 16
    %v1096 = vrot.slane %v1094, 1
    %v1097 = vor.u32 %v1092, %v1096
    %v1099 = vshrl.u32 %v1022, 16
    %v1101 = vshll.u32 %v1022, 16
    %v1103 = vrot.slane %v1101, 1
    %v1104 = vor.u32 %v1099, %v1103
    %v1106 = vshrl.u32 %v1023, 16
    %v1108 = vshll.u32 %v1023, 16
    %v1110 = vrot.slane %v1108, 1
    %v1111 = vor.u32 %v1106, %v1110
    %v1113 = vshrl.u32 %v1024, 16
    %v1115 = vshll.u32 %v1024, 16
    %v1117 = vrot.slane %v1115, 1
    %v1118 = vor.u32 %v1113, %v1117
    %v1120 = vshrl.u32 %v1025, 16
    %v1122 = vshll.u32 %v1025, 16
    %v1124 = vrot.slane %v1122, 1
    %v1125 = vor.u32 %v1120, %v1124
    %v1127 = vshrl.u32 %v1026, 16
    %v1129 = vshll.u32 %v1026, 16
    %v1131 = vrot.slane %v1129, 1
    %v1132 = vor.u32 %v1127, %v1131
    %v1134 = vshrl.u32 %v1027, 16
    %v1136 = vshll.u32 %v1027, 16
    %v1138 = vrot.slane %v1136, 1
    %v1139 = vor.u32 %v1134, %v1138
    %1140 = vrot.lane.b32.xlu0 %v1034, 32
    %v1141 = vpop.permute.xlu0 %1140
    %1142 = vrot.lane.b32.xlu0 %v1041, 32
    %v1143 = vpop.permute.xlu0 %1142
    %1144 = vrot.lane.b32.xlu0 %v1048, 32
    %v1145 = vpop.permute.xlu0 %1144
    %1146 = vrot.lane.b32.xlu0 %v1055, 32
    %v1147 = vpop.permute.xlu0 %1146
    %1148 = vrot.lane.b32.xlu0 %v1062, 32
    %v1149 = vpop.permute.xlu0 %1148
    %1150 = vrot.lane.b32.xlu0 %v1069, 32
    %v1151 = vpop.permute.xlu0 %1150
    %1152 = vrot.lane.b32.xlu0 %v1076, 32
    %v1153 = vpop.permute.xlu0 %1152
    %1154 = vrot.lane.b32.xlu0 %v1083, 32
    %v1155 = vpop.permute.xlu0 %1154
    %1156 = vrot.lane.b32.xlu0 %v1090, 32
    %v1157 = vpop.permute.xlu0 %1156
    %1158 = vrot.lane.b32.xlu0 %v1097, 32
    %v1159 = vpop.permute.xlu0 %1158
    %1160 = vrot.lane.b32.xlu0 %v1104, 32
    %v1161 = vpop.permute.xlu0 %1160
    %1162 = vrot.lane.b32.xlu0 %v1111, 32
    %v1163 = vpop.permute.xlu0 %1162
    %1164 = vrot.lane.b32.xlu0 %v1118, 32
    %v1165 = vpop.permute.xlu0 %1164
    %1166 = vrot.lane.b32.xlu0 %v1125, 32
    %v1167 = vpop.permute.xlu0 %1166
    %1168 = vrot.lane.b32.xlu0 %v1132, 32
    %v1169 = vpop.permute.xlu0 %1168
    %1170 = vrot.lane.b32.xlu0 %v1139, 32
    %v1171 = vpop.permute.xlu0 %1170
    %vm1172 = vcmask 31744
    %v1175 = vsel %vm1172, %v15, %v213
    %v1178 = vsel %vm1172, %v16, %v215
    %v1181 = vsel %vm1172, %v17, %v217
    %v1184 = vsel %vm1172, %v18, %v219
    %v1187 = vsel %vm1172, %v19, %v221
    %v1190 = vsel %vm1172, %v20, %v223
    %v1193 = vsel %vm1172, %v21, %v225
    %v1196 = vsel %vm1172, %v22, %v227
    %v1199 = vsel %vm1172, %v23, %v229
    %v1202 = vsel %vm1172, %v24, %v231
    %v1205 = vsel %vm1172, %v25, %v233
    %v1208 = vsel %vm1172, %v26, %v235
    %v1211 = vsel %vm1172, %v27, %v237
    %v1214 = vsel %vm1172, %v28, %v239
    %v1217 = vsel %vm1172, %v29, %v241
    %v1220 = vsel %vm1172, %v30, %v243
    %vm1221 = vcmask 64512
    %v1223 = vsel %vm1221, %v1175, %v437
    %v1225 = vsel %vm1221, %v1178, %v439
    %v1227 = vsel %vm1221, %v1181, %v441
    %v1229 = vsel %vm1221, %v1184, %v443
    %v1231 = vsel %vm1221, %v1187, %v445
    %v1233 = vsel %vm1221, %v1190, %v447
    %v1235 = vsel %vm1221, %v1193, %v449
    %v1237 = vsel %vm1221, %v1196, %v451
    %v1239 = vsel %vm1221, %v1199, %v453
    %v1241 = vsel %vm1221, %v1202, %v455
    %v1243 = vsel %vm1221, %v1205, %v457
    %v1245 = vsel %vm1221, %v1208, %v459
    %v1247 = vsel %vm1221, %v1211, %v461
    %v1249 = vsel %vm1221, %v1214, %v463
    %v1251 = vsel %vm1221, %v1217, %v465
    %v1253 = vsel %vm1221, %v1220, %v467
    %vm1254 = vcmask 97280
    %v1256 = vsel %vm1254, %v1223, %v517
    %v1258 = vsel %vm1254, %v1225, %v519
    %v1260 = vsel %vm1254, %v1227, %v521
    %v1262 = vsel %vm1254, %v1229, %v523
    %v1264 = vsel %vm1254, %v1231, %v525
    %v1266 = vsel %vm1254, %v1233, %v527
    %v1268 = vsel %vm1254, %v1235, %v529
    %v1270 = vsel %vm1254, %v1237, %v531
    %v1272 = vsel %vm1254, %v1239, %v533
    %v1274 = vsel %vm1254, %v1241, %v535
    %v1276 = vsel %vm1254, %v1243, %v537
    %v1278 = vsel %vm1254, %v1245, %v539
    %v1280 = vsel %vm1254, %v1247, %v541
    %v1282 = vsel %vm1254, %v1249, %v543
    %v1284 = vsel %vm1254, %v1251, %v545
    %v1286 = vsel %vm1254, %v1253, %v547
    %vm1287 = vcmask 130048
    %v1289 = vsel %vm1287, %v1256, %v597
    %v1291 = vsel %vm1287, %v1258, %v599
    %v1293 = vsel %vm1287, %v1260, %v601
    %v1295 = vsel %vm1287, %v1262, %v603
    %v1297 = vsel %vm1287, %v1264, %v605
    %v1299 = vsel %vm1287, %v1266, %v607
    %v1301 = vsel %vm1287, %v1268, %v609
    %v1303 = vsel %vm1287, %v1270, %v611
    %v1305 = vsel %vm1287, %v1272, %v613
    %v1307 = vsel %vm1287, %v1274, %v615
    %v1309 = vsel %vm1287, %v1276, %v617
    %v1311 = vsel %vm1287, %v1278, %v619
    %v1313 = vsel %vm1287, %v1280, %v621
    %v1315 = vsel %vm1287, %v1282, %v623
    %v1317 = vsel %vm1287, %v1284, %v625
    %v1319 = vsel %vm1287, %v1286, %v627
    %vm1320 = vcmask 162816
    %v1322 = vsel %vm1320, %v1289, %v789
    %v1324 = vsel %vm1320, %v1291, %v791
    %v1326 = vsel %vm1320, %v1293, %v793
    %v1328 = vsel %vm1320, %v1295, %v795
    %v1330 = vsel %vm1320, %v1297, %v797
    %v1332 = vsel %vm1320, %v1299, %v799
    %v1334 = vsel %vm1320, %v1301, %v801
    %v1336 = vsel %vm1320, %v1303, %v803
    %v1338 = vsel %vm1320, %v1305, %v805
    %v1340 = vsel %vm1320, %v1307, %v807
    %v1342 = vsel %vm1320, %v1309, %v809
    %v1344 = vsel %vm1320, %v1311, %v811
    %v1346 = vsel %vm1320, %v1313, %v813
    %v1348 = vsel %vm1320, %v1315, %v815
    %v1350 = vsel %vm1320, %v1317, %v817
    %v1352 = vsel %vm1320, %v1319, %v819
    %vm1353 = vcmask 195584
    %v1355 = vsel %vm1353, %v1322, %v869
    %v1357 = vsel %vm1353, %v1324, %v871
    %v1359 = vsel %vm1353, %v1326, %v873
    %v1361 = vsel %vm1353, %v1328, %v875
    %v1363 = vsel %vm1353, %v1330, %v877
    %v1365 = vsel %vm1353, %v1332, %v879
    %v1367 = vsel %vm1353, %v1334, %v881
    %v1369 = vsel %vm1353, %v1336, %v883
    %v1371 = vsel %vm1353, %v1338, %v885
    %v1373 = vsel %vm1353, %v1340, %v887
    %v1375 = vsel %vm1353, %v1342, %v889
    %v1377 = vsel %vm1353, %v1344, %v891
    %v1379 = vsel %vm1353, %v1346, %v893
    %v1381 = vsel %vm1353, %v1348, %v895
    %v1383 = vsel %vm1353, %v1350, %v897
    %v1385 = vsel %vm1353, %v1352, %v899
    %vm1386 = vcmask 228352
    %v1388 = vsel %vm1386, %v1355, %v949
    %v1390 = vsel %vm1386, %v1357, %v951
    %v1392 = vsel %vm1386, %v1359, %v953
    %v1394 = vsel %vm1386, %v1361, %v955
    %v1396 = vsel %vm1386, %v1363, %v957
    %v1398 = vsel %vm1386, %v1365, %v959
    %v1400 = vsel %vm1386, %v1367, %v961
    %v1402 = vsel %vm1386, %v1369, %v963
    %v1404 = vsel %vm1386, %v1371, %v965
    %v1406 = vsel %vm1386, %v1373, %v967
    %v1408 = vsel %vm1386, %v1375, %v969
    %v1410 = vsel %vm1386, %v1377, %v971
    %v1412 = vsel %vm1386, %v1379, %v973
    %v1414 = vsel %vm1386, %v1381, %v975
    %v1416 = vsel %vm1386, %v1383, %v977
    %v1418 = vsel %vm1386, %v1385, %v979
    %vm1419 = vcmask 261120
    %v1421 = vsel %vm1419, %v1388, %v1141
    %v1423 = vsel %vm1419, %v1390, %v1143
    %v1425 = vsel %vm1419, %v1392, %v1145
    %v1427 = vsel %vm1419, %v1394, %v1147
    %v1429 = vsel %vm1419, %v1396, %v1149
    %v1431 = vsel %vm1419, %v1398, %v1151
    %v1433 = vsel %vm1419, %v1400, %v1153
    %v1435 = vsel %vm1419, %v1402, %v1155
    %v1437 = vsel %vm1419, %v1404, %v1157
    %v1439 = vsel %vm1419, %v1406, %v1159
    %v1441 = vsel %vm1419, %v1408, %v1161
    %v1443 = vsel %vm1419, %v1410, %v1163
    %v1445 = vsel %vm1419, %v1412, %v1165
    %v1447 = vsel %vm1419, %v1414, %v1167
    %v1449 = vsel %vm1419, %v1416, %v1169
    %v1451 = vsel %vm1419, %v1418, %v1171
    %v1452 = vld [vmem:[%s1] sm:$0xf]
    %v1453 = vld [vmem:[%s1 + $0x4] sm:$0xf]
    %v1454 = vld [vmem:[%s1 + $0x8] sm:$0xf]
    %v1455 = vld [vmem:[%s1 + $0xc] sm:$0xf]
    %v1456 = vld [vmem:[%s1 + $0x10] sm:$0x3]
    %v1473 = vunpack.c.l.b16 %v1421
    %v1474 = vunpack.c.l.b16 %v1423
    %v1475 = vunpack.c.l.b16 %v1425
    %v1476 = vunpack.c.l.b16 %v1427
    %v1477 = vunpack.c.l.b16 %v1429
    %v1478 = vunpack.c.l.b16 %v1431
    %v1479 = vunpack.c.l.b16 %v1433
    %v1480 = vunpack.c.l.b16 %v1435
    %v1481 = vunpack.c.l.b16 %v1437
    %v1482 = vunpack.c.l.b16 %v1439
    %v1483 = vunpack.c.l.b16 %v1441
    %v1484 = vunpack.c.l.b16 %v1443
    %v1485 = vunpack.c.l.b16 %v1445
    %v1486 = vunpack.c.l.b16 %v1447
    %v1487 = vunpack.c.l.b16 %v1449
    %v1488 = vunpack.c.l.b16 %v1451
    %v1489 = vpack.c.b16 %v1474, %v1473
    %v1490 = vpack.c.b16 %v1476, %v1475
    %v1491 = vpack.c.b16 %v1478, %v1477
    %v1492 = vpack.c.b16 %v1480, %v1479
    %v1493 = vpack.c.b16 %v1482, %v1481
    %v1494 = vpack.c.b16 %v1484, %v1483
    %v1495 = vpack.c.b16 %v1486, %v1485
    %v1496 = vpack.c.b16 %v1488, %v1487
    %v1502 = vunpack.c.l.b16 %v1452
    %v1503 = vunpack.c.l.b16 %v1453
    %v1504 = vunpack.c.l.b16 %v1454
    %v1505 = vunpack.c.l.b16 %v1455
    %v1506 = vunpack.c.l.b16 %v1456
    %v1507 = vpack.c.b16 %v1503, %v1502
    %v1508 = vpack.c.b16 %v1505, %v1504
    %v1509 = vpack.c.b16 %v1506, %v1506
    %vm1512 = vcmask 293888
    %v1514 = vsel %vm1512, %v1489, 0
    %v1517 = vsel %vm1512, %v1490, 0
    %v1520 = vsel %vm1512, %v1491, 0
    %v1523 = vsel %vm1512, %v1492, 0
    %v1526 = vsel %vm1512, %v1493, 0
    %v1529 = vsel %vm1512, %v1494, 0
    %v1532 = vsel %vm1512, %v1495, 0
    %v1535 = vsel %vm1512, %v1496, 0
    %vm1537 = vcmask 1041408
    %v1539 = vsel %vm1537, %v1509, 0
    %1541 = vmatprep.subr.bf16.mxu0 0
    %1542 = vmatpush1.bf16.msra.mxu0 %v1507
    %1543 = vmatprep.subr.bf16.mxu0 0
    %1544 = vmatpush1.bf16.msra.mxu0 %v1508
    %1545 = vmatprep.subr.bf16.mxu0 0
    %1546 = vmatpush1.bf16.msra.mxu0 %v1539
    %1547 = vmatprep.subr.bf16.mxu0 0
    %1548 = vmatpush1.bf16.msra.mxu0 0
    %1549 = vmatprep.subr.bf16.mxu0 0
    %1550 = vmatpush1.bf16.msra.mxu0 0
    %1551 = vmatprep.subr.bf16.mxu0 0
    %1552 = vmatpush1.bf16.msra.mxu0 0
    %1553 = vmatprep.subr.bf16.mxu0 0
    %1554 = vmatpush1.bf16.msra.mxu0 0
    %1555 = vmatprep.subr.bf16.mxu0 0
    %1556 = vmatpush1.bf16.msra.mxu0 0
    %1557 = vmatprep.subr.bf16.mxu0 0
    %1558 = vmatpush1.bf16.msra.mxu0 0
    %1559 = vmatprep.subr.bf16.mxu0 0
    %1560 = vmatpush1.bf16.msra.mxu0 0
    %1561 = vmatprep.subr.bf16.mxu0 0
    %1562 = vmatpush1.bf16.msra.mxu0 0
    %1563 = vmatprep.subr.bf16.mxu0 0
    %1564 = vmatpush1.bf16.msra.mxu0 0
    %1565 = vmatprep.subr.bf16.mxu0 0
    %1566 = vmatpush1.bf16.msra.mxu0 0
    %1567 = vmatprep.subr.bf16.mxu0 0
    %1568 = vmatpush1.bf16.msra.mxu0 0
    %1569 = vmatprep.subr.bf16.mxu0 0
    %1570 = vmatpush1.bf16.msra.mxu0 0
    %1571 = vmatprep.subr.bf16.mxu0 0
    %1572 = vmatpush1.bf16.msra.mxu0 0
    %1573 = vmatprep.mubr.bf16.mxu0 0
    %1574 = vmatmul.mubr.bf16.gmra.mrb[0].mxu0 %v1514
    %v1575 = vpop.f32.mrb[0].mxu0
    %v1576 = vadd.f32 0.0, %v1575
    %v1577 = vpop.f32.mrb[0].mxu0
    %v1578 = vpop.f32.mrb[0].mxu0
    %v1579 = vadd.f32 0.0, %v1578
    %v1580 = vpop.f32.mrb[0].mxu0
    %1581 = vmatprep.mubr.bf16.mxu0 0
    %1582 = vmatmul.mubr.bf16.gmra.mrb[0].mxu0 %v1517
    %v1583 = vpop.f32.mrb[0].mxu0
    %v1584 = vadd.f32 0.0, %v1583
    %v1585 = vpop.f32.mrb[0].mxu0
    %v1586 = vpop.f32.mrb[0].mxu0
    %v1587 = vadd.f32 0.0, %v1586
    %v1588 = vpop.f32.mrb[0].mxu0
    %1589 = vmatprep.mubr.bf16.mxu0 0
    %1590 = vmatmul.mubr.bf16.gmra.mrb[0].mxu0 %v1520
    %v1591 = vpop.f32.mrb[0].mxu0
    %v1592 = vadd.f32 0.0, %v1591
    %v1593 = vpop.f32.mrb[0].mxu0
    %v1594 = vpop.f32.mrb[0].mxu0
    %v1595 = vadd.f32 0.0, %v1594
    %v1596 = vpop.f32.mrb[0].mxu0
    %1597 = vmatprep.mubr.bf16.mxu0 0
    %1598 = vmatmul.mubr.bf16.gmra.mrb[0].mxu0 %v1523
    %v1599 = vpop.f32.mrb[0].mxu0
    %v1600 = vadd.f32 0.0, %v1599
    %v1601 = vpop.f32.mrb[0].mxu0
    %v1602 = vpop.f32.mrb[0].mxu0
    %v1603 = vadd.f32 0.0, %v1602
    %v1604 = vpop.f32.mrb[0].mxu0
    %1605 = vmatprep.mubr.bf16.mxu0 0
    %1606 = vmatmul.mubr.bf16.gmra.mrb[0].mxu0 %v1526
    %v1607 = vpop.f32.mrb[0].mxu0
    %v1608 = vadd.f32 0.0, %v1607
    %v1609 = vpop.f32.mrb[0].mxu0
    %v1610 = vpop.f32.mrb[0].mxu0
    %v1611 = vadd.f32 0.0, %v1610
    %v1612 = vpop.f32.mrb[0].mxu0
    %1613 = vmatprep.mubr.bf16.mxu0 0
    %1614 = vmatmul.mubr.bf16.gmra.mrb[0].mxu0 %v1529
    %v1615 = vpop.f32.mrb[0].mxu0
    %v1616 = vadd.f32 0.0, %v1615
    %v1617 = vpop.f32.mrb[0].mxu0
    %v1618 = vpop.f32.mrb[0].mxu0
    %v1619 = vadd.f32 0.0, %v1618
    %v1620 = vpop.f32.mrb[0].mxu0
    %1621 = vmatprep.mubr.bf16.mxu0 0
    %1622 = vmatmul.mubr.bf16.gmra.mrb[0].mxu0 %v1532
    %v1623 = vpop.f32.mrb[0].mxu0
    %v1624 = vadd.f32 0.0, %v1623
    %v1625 = vpop.f32.mrb[0].mxu0
    %v1626 = vpop.f32.mrb[0].mxu0
    %v1627 = vadd.f32 0.0, %v1626
    %v1628 = vpop.f32.mrb[0].mxu0
    %1629 = vmatprep.mubr.bf16.mxu0 0
    %1630 = vmatmul.mubr.bf16.gmra.mrb[0].mxu0 %v1535
    %v1631 = vpop.f32.mrb[0].mxu0
    %v1632 = vadd.f32 0.0, %v1631
    %v1633 = vpop.f32.mrb[0].mxu0
    %v1634 = vpop.f32.mrb[0].mxu0
    %v1635 = vadd.f32 0.0, %v1634
    %v1636 = vpop.f32.mrb[0].mxu0
    %1637 = vdwg.mxu0
    %1638 = vst.msk [vmem:[%s2] sm:$0xff] %vm1221, %v1576
    %1639 = vst.msk [vmem:[%s2 + $0x8] sm:$0xff] %vm1221, %v1579
    %1640 = vst.msk [vmem:[%s2 + $0x10] sm:$0xff] %vm1221, %v1584
    %1641 = vst.msk [vmem:[%s2 + $0x18] sm:$0xff] %vm1221, %v1587
    %1642 = vst.msk [vmem:[%s2 + $0x20] sm:$0xff] %vm1221, %v1592
    %1643 = vst.msk [vmem:[%s2 + $0x28] sm:$0xff] %vm1221, %v1595
    %1644 = vst.msk [vmem:[%s2 + $0x30] sm:$0xff] %vm1221, %v1600
    %1645 = vst.msk [vmem:[%s2 + $0x38] sm:$0xff] %vm1221, %v1603
    %1646 = vst.msk [vmem:[%s2 + $0x40] sm:$0xff] %vm1221, %v1608
    %1647 = vst.msk [vmem:[%s2 + $0x48] sm:$0xff] %vm1221, %v1611
    %1648 = vst.msk [vmem:[%s2 + $0x50] sm:$0xff] %vm1221, %v1616
    %1649 = vst.msk [vmem:[%s2 + $0x58] sm:$0xff] %vm1221, %v1619
    %1650 = vst.msk [vmem:[%s2 + $0x60] sm:$0xff] %vm1221, %v1624
    %1651 = vst.msk [vmem:[%s2 + $0x68] sm:$0xff] %vm1221, %v1627
    %1652 = vst.msk [vmem:[%s2 + $0x70] sm:$0xff] %vm1221, %v1632
    %1653 = vst.msk [vmem:[%s2 + $0x78] sm:$0xff] %vm1221, %v1635
    %v1654 = vsel %vm1221, %v1576, 0.0
    %v1655 = vsel %vm1221, %v1579, 0.0
    %v1656 = vadd.f32 %v1654, %v1655
    %v1657 = vsel %vm1221, %v1584, 0.0
    %v1658 = vadd.f32 %v1656, %v1657
    %v1659 = vsel %vm1221, %v1587, 0.0
    %v1660 = vadd.f32 %v1658, %v1659
    %v1661 = vsel %vm1221, %v1592, 0.0
    %v1662 = vadd.f32 %v1660, %v1661
    %v1663 = vsel %vm1221, %v1595, 0.0
    %v1664 = vadd.f32 %v1662, %v1663
    %v1665 = vsel %vm1221, %v1600, 0.0
    %v1666 = vadd.f32 %v1664, %v1665
    %v1667 = vsel %vm1221, %v1603, 0.0
    %v1668 = vadd.f32 %v1666, %v1667
    %v1669 = vsel %vm1221, %v1608, 0.0
    %v1670 = vadd.f32 %v1668, %v1669
    %v1671 = vsel %vm1221, %v1611, 0.0
    %v1672 = vadd.f32 %v1670, %v1671
    %v1673 = vsel %vm1221, %v1616, 0.0
    %v1674 = vadd.f32 %v1672, %v1673
    %v1675 = vsel %vm1221, %v1619, 0.0
    %v1676 = vadd.f32 %v1674, %v1675
    %v1677 = vsel %vm1221, %v1624, 0.0
    %v1678 = vadd.f32 %v1676, %v1677
    %v1679 = vsel %vm1221, %v1627, 0.0
    %v1680 = vadd.f32 %v1678, %v1679
    %v1681 = vsel %vm1221, %v1632, 0.0
    %v1682 = vadd.f32 %v1680, %v1681
    %v1683 = vsel %vm1221, %v1635, 0.0
    %v1684 = vadd.f32 %v1682, %v1683
    %v1685 = vrot.slane %v1684, 4
    %v1686 = vadd.f32 %v1684, %v1685
    %v1687 = vrot.slane %v1686, 2
    %v1688 = vadd.f32 %v1686, %v1687
    %v1689 = vrot.slane %v1688, 1
    %v1690 = vadd.f32 %v1688, %v1689
    %v1691 = vmul.f32 %v1576, %v1576
    %v1692 = vmul.f32 %v1579, %v1579
    %v1693 = vmul.f32 %v1584, %v1584
    %v1694 = vmul.f32 %v1587, %v1587
    %v1695 = vmul.f32 %v1592, %v1592
    %v1696 = vmul.f32 %v1595, %v1595
    %v1697 = vmul.f32 %v1600, %v1600
    %v1698 = vmul.f32 %v1603, %v1603
    %v1699 = vmul.f32 %v1608, %v1608
    %v1700 = vmul.f32 %v1611, %v1611
    %v1701 = vmul.f32 %v1616, %v1616
    %v1702 = vmul.f32 %v1619, %v1619
    %v1703 = vmul.f32 %v1624, %v1624
    %v1704 = vmul.f32 %v1627, %v1627
    %v1705 = vmul.f32 %v1632, %v1632
    %v1706 = vmul.f32 %v1635, %v1635
    %v1707 = vsel %vm1221, %v1691, 0.0
    %v1708 = vsel %vm1221, %v1692, 0.0
    %v1709 = vadd.f32 %v1707, %v1708
    %v1710 = vsel %vm1221, %v1693, 0.0
    %v1711 = vadd.f32 %v1709, %v1710
    %v1712 = vsel %vm1221, %v1694, 0.0
    %v1713 = vadd.f32 %v1711, %v1712
    %v1714 = vsel %vm1221, %v1695, 0.0
    %v1715 = vadd.f32 %v1713, %v1714
    %v1716 = vsel %vm1221, %v1696, 0.0
    %v1717 = vadd.f32 %v1715, %v1716
    %v1718 = vsel %vm1221, %v1697, 0.0
    %v1719 = vadd.f32 %v1717, %v1718
    %v1720 = vsel %vm1221, %v1698, 0.0
    %v1721 = vadd.f32 %v1719, %v1720
    %v1722 = vsel %vm1221, %v1699, 0.0
    %v1723 = vadd.f32 %v1721, %v1722
    %v1724 = vsel %vm1221, %v1700, 0.0
    %v1725 = vadd.f32 %v1723, %v1724
    %v1726 = vsel %vm1221, %v1701, 0.0
    %v1727 = vadd.f32 %v1725, %v1726
    %v1728 = vsel %vm1221, %v1702, 0.0
    %v1729 = vadd.f32 %v1727, %v1728
    %v1730 = vsel %vm1221, %v1703, 0.0
    %v1731 = vadd.f32 %v1729, %v1730
    %v1732 = vsel %vm1221, %v1704, 0.0
    %v1733 = vadd.f32 %v1731, %v1732
    %v1734 = vsel %vm1221, %v1705, 0.0
    %v1735 = vadd.f32 %v1733, %v1734
    %v1736 = vsel %vm1221, %v1706, 0.0
    %v1737 = vadd.f32 %v1735, %v1736
    %v1738 = vrot.slane %v1737, 4
    %v1739 = vadd.f32 %v1737, %v1738
    %v1740 = vrot.slane %v1739, 2
    %v1741 = vadd.f32 %v1739, %v1740
    %v1742 = vrot.slane %v1741, 1
    %v1743 = vadd.f32 %v1741, %v1742
    %vm1744 = vcmask 1040384
    %v1745 = vsel %vm1744, %v1690, %v1743
    %vm1746 = vcmask 58368
    %1747 = vst.msk [vmem:[#allocation2] sm:$0x3] %vm1746, %v1745
    // Predicated region
    $region10: #{tpu_custom_call.1} parent=1 // pred_check
      _
    $region11: #{tpu_custom_call.1} parent=1 // pred_check_branch
      %1749 = sbr.rel (0) target = $region13
    $region12: #{tpu_custom_call.1} parent=1 // pred_region
      _
    $region13: #{tpu_custom_call.1} parent=1 // pred_fallthru
      _
    // Predicated region
    $region14: #{tpu_custom_call.1} parent=1 // pred_check
      _
    $region15: #{tpu_custom_call.1} parent=1 // pred_check_branch
      %1751 = sbr.rel (0) target = $region17
    $region16: #{tpu_custom_call.1} parent=1 // pred_region
      %s1753 = ssub.s32 32, 32
      %1754 = vsyncadd [#allocation3], %s1753
      %s1756 = sshll.u32 [#allocation2], 4
      %s1757 = int_to_ptr.vmem [resolvable:$true] %s1756
      %1759 = dma.vmem_to_hbm [thread:$0]  %s1757, 32, %s3, [#allocation3]
    $region17: #{tpu_custom_call.1} parent=1 // pred_fallthru
      _
    // Predicated region
    $region18: #{tpu_custom_call.1} parent=1 // pred_check
      _
    $region19: #{tpu_custom_call.1} parent=1 // pred_check_branch
      %1761 = sbr.rel (0) target = $region21
    $region20: #{tpu_custom_call.1} parent=1 // pred_region
      _
    $region21: #{tpu_custom_call.1} parent=1 // pred_fallthru
      _
    // Predicated region
    $region22: #{tpu_custom_call.1} parent=1 // pred_check
      _
    $region23: #{tpu_custom_call.1} parent=1 // pred_check_branch
      %1763 = sbr.rel (0) target = $region25
    $region24: #{tpu_custom_call.1} parent=1 // pred_region
      %1764 = dma.done [#allocation3], 32
    $region25: #{tpu_custom_call.1} parent=1 // pred_fallthru
      _
    %1765 = vsyncpa [#allocation3], 1

</llo_original>
